<compile_context>
chip_gen: v7x
topology: tpu7x:2x2x1
jax: 0.10.0
libtpu: 0.0.40
codegen_flags: <defaults>
</compile_context>

<pallas_src>
import math

import jax
import jax.numpy as jnp
from jax.experimental import pallas as pl
from jax.experimental.pallas import tpu as pltpu

# ----- model hyper-parameters (small, consistent with the module) -----
D_MODEL = 32            # emsize
NHEAD = 4
HEAD_DIM = D_MODEL // NHEAD
DIM_FF = 64             # dim_feedforward
NUM_LAYERS = 2          # num_encoder_layers
NUM_TOKENS = 16         # sim.num_tokens
SEQ = 8
BATCH = 2
BS = BATCH * SEQ        # 16 tokens total (both batch rows stacked)
STACK = NHEAD * BS      # 64 = head-major sublane-stacked attention rows
LN_EPS = 1e-5
LANES = 128
NEG = -1e9              # additive mask value (exp underflows to exactly 0)

# --------------------------------------------------------------------------
# Static slab layouts (pure Python, known at kernel-trace time)
# --------------------------------------------------------------------------
def _make_layout(entries, row_align):
    off, shp, rows = {}, {}, 0
    for name, (r, c) in entries:
        off[name] = rows
        shp[name] = (r, c)
        rows += -(-r // row_align) * row_align
    return off, shp, rows


# bf16 weight slab: all matmul weights, pre-transposed (row blocks are multiples
# of 16 rows so every slice is sublane-pack aligned).
_W_ENTRIES = [("emb", (NUM_TOKENS, D_MODEL))]
for _l in range(NUM_LAYERS):
    _W_ENTRIES += [
        (f"wqkv{_l}", (D_MODEL, 3 * D_MODEL)),
        (f"wo{_l}",   (D_MODEL, D_MODEL)),
        (f"w1{_l}",   (D_MODEL, DIM_FF)),
        (f"w2{_l}",   (DIM_FF, D_MODEL)),
    ]
_W_ENTRIES += [("dec_w", (D_MODEL, NUM_TOKENS))]
W_OFF, W_SHP, W_ROWS = _make_layout(_W_ENTRIES, 16)

# f32 slab: PE, attention mask, biases, LN params, decoder bias (8-row aligned).
_F_ENTRIES = [("pe", (BS, D_MODEL)), ("mask", (STACK, STACK))]
for _l in range(NUM_LAYERS):
    _F_ENTRIES += [
        (f"bqkv{_l}", (1, 3 * D_MODEL)),
        (f"bo{_l}",   (1, D_MODEL)),
        (f"g1{_l}",   (1, D_MODEL)),
        (f"be1{_l}",  (1, D_MODEL)),
        (f"b1{_l}",   (1, DIM_FF)),
        (f"b2{_l}",   (1, D_MODEL)),
        (f"g2{_l}",   (1, D_MODEL)),
        (f"be2{_l}",  (1, D_MODEL)),
    ]
_F_ENTRIES += [("dec_b", (1, NUM_TOKENS))]
F_OFF, F_SHP, F_ROWS = _make_layout(_F_ENTRIES, 8)


# --------------------------------------------------------------------------
# Kernel helpers
# --------------------------------------------------------------------------
def _layer_norm(x, gamma, beta):
    # Two independent lane reductions (sum, sum of squares); stats in f32.
    inv_d = 1.0 / D_MODEL
    mean = jnp.sum(x, axis=-1, keepdims=True) * inv_d
    ex2 = jnp.sum(x * x, axis=-1, keepdims=True) * inv_d
    var = ex2 - mean * mean
    return (x - mean) * jax.lax.rsqrt(var + LN_EPS) * gamma + beta


# --------------------------------------------------------------------------
# Fused Pallas kernel: embedding + PE + 2 encoder layers + decoder
# --------------------------------------------------------------------------
def fused_forward_kernel(onehot_ref, w_ref, f_ref, o_ref):
    f32 = jnp.float32
    bf16 = jnp.bfloat16

    def wsl(name):                       # static view into the bf16 weight slab
        o = W_OFF[name]
        r, c = W_SHP[name]
        return w_ref[pl.ds(o, r), pl.ds(0, c)]

    def fsl(name):                       # static view into the f32 slab
        o = F_OFF[name]
        r, c = F_SHP[name]
        return f_ref[pl.ds(o, r), pl.ds(0, c)]

    # ---- embedding gather (one-hot MXU matmul) + positional encoding ----
    x = jnp.dot(onehot_ref[...], wsl("emb"),
                preferred_element_type=f32) + fsl("pe")          # (BS, D) f32

    mask = fsl("mask")                                           # (64, 64) f32

    for l in range(NUM_LAYERS):                                  # static unroll
        # ---- QKV projection (softmax scale pre-folded into Q weights/bias) ----
        qkv = jnp.dot(x.astype(bf16), wsl(f"wqkv{l}"),
                      preferred_element_type=f32) + fsl(f"bqkv{l}")   # (16, 96)

        # head-major sublane stacking: group h = all 16 tokens of head h
        q_s = jnp.concatenate(
            [qkv[:, h * HEAD_DIM:(h + 1) * HEAD_DIM]
             for h in range(NHEAD)], axis=0)                          # (64, 8)
        k_s = jnp.concatenate(
            [qkv[:, D_MODEL + h * HEAD_DIM: D_MODEL + (h + 1) * HEAD_DIM]
             for h in range(NHEAD)], axis=0)                          # (64, 8)
        v_s = jnp.concatenate(
            [qkv[:, 2 * D_MODEL + h * HEAD_DIM: 2 * D_MODEL + (h + 1) * HEAD_DIM]
             for h in range(NHEAD)], axis=0)                          # (64, 8)

        # ---- ONE score matmul for all (batch, head) pairs + block-diag mask ----
        s = jax.lax.dot_general(q_s.astype(bf16), k_s.astype(bf16),
                                (((1,), (1,)), ((), ())),
                                preferred_element_type=f32) + mask    # (64, 64)

        # one batched softmax (f32), approximate reciprocal on the EUP
        s = s - jnp.max(s, axis=-1, keepdims=True)
        p = jnp.exp(s)
        p = p * pl.reciprocal(jnp.sum(p, axis=-1, keepdims=True), approx=True)

        # ---- ONE PV matmul (masked entries of p are exactly zero) ----
        ctx = jnp.dot(p.astype(bf16), v_s.astype(bf16),
                      preferred_element_type=f32)                     # (64, 8)

        # ---- output projection: 4 per-head (16,8)@(8,32) accumulating matmuls
        # (no ctx re-pack; MRB in-place accumulate on v7x, ~wash on v5e/v6e) ----
        wo = wsl(f"wo{l}")                                            # (32, 32)
        attn = jnp.zeros((BS, D_MODEL), f32)
        for h in range(NHEAD):
            attn = attn + jnp.dot(
                ctx[h * BS:(h + 1) * BS, :].astype(bf16),
                wo[h * HEAD_DIM:(h + 1) * HEAD_DIM, :],
                preferred_element_type=f32)
        attn = attn + fsl(f"bo{l}")

        # ---- residual + LN1, FFN (relu), residual + LN2 (post-LN) ----
        x1 = _layer_norm(x + attn, fsl(f"g1{l}"), fsl(f"be1{l}"))
        h1 = jnp.dot(x1.astype(bf16), wsl(f"w1{l}"),
                     preferred_element_type=f32) + fsl(f"b1{l}")
        h1 = jnp.maximum(h1, 0.0)
        ff = jnp.dot(h1.astype(bf16), wsl(f"w2{l}"),
                     preferred_element_type=f32) + fsl(f"b2{l}")
        x = _layer_norm(x1 + ff, fsl(f"g2{l}"), fsl(f"be2{l}"))

    # ---- decoder Linear(d_model -> num_tokens), single full-tile store ----
    o_ref[...] = (jnp.dot(x.astype(bf16), wsl("dec_w"),
                          preferred_element_type=f32) + fsl("dec_b"))


# --------------------------------------------------------------------------
# Host-side one-time packing (NOT in the per-call hot path)
# --------------------------------------------------------------------------
def _pack_slab(arrays, entries, off, rows_total, dtype):
    slab = jnp.zeros((rows_total, LANES), dtype)
    for name, (r, c) in entries:
        a = jnp.asarray(arrays[name], jnp.float32).astype(dtype)
        slab = slab.at[off[name]:off[name] + r, :c].set(a)
    return slab


def _block_diag_mask():
    g = jnp.arange(STACK) // SEQ
    return jnp.where(g[:, None] == g[None, :], 0.0, NEG).astype(jnp.float32)


def pack_params(emb, dec_w, dec_b, layers, pe):
    """Build the two VMEM slabs once. Weights pre-transposed, scale folded."""
    scale = 1.0 / math.sqrt(HEAD_DIM)
    wdict = {"emb": emb, "dec_w": dec_w.T}
    fdict = {"pe": jnp.tile(pe[0, :SEQ, :], (BATCH, 1)),
             "mask": _block_diag_mask(),
             "dec_b": dec_b}
    for l, (wqkv, bqkv, wo, bo, g1, be1, w1, b1, w2, b2, g2, be2) in enumerate(layers):
        wqkv_t = wqkv.T                                   # (D, 3D)
        wqkv_t = wqkv_t.at[:, :D_MODEL].multiply(scale)   # fold 1/sqrt(hd) into Q
        bqkv_s = bqkv.at[:, :D_MODEL].multiply(scale)
        wdict.update({f"wqkv{l}": wqkv_t, f"wo{l}": wo.T,
                      f"w1{l}": w1.T, f"w2{l}": w2.T})
        fdict.update({f"bqkv{l}": bqkv_s, f"bo{l}": bo,
                      f"g1{l}": g1, f"be1{l}": be1, f"b1{l}": b1,
                      f"b2{l}": b2, f"g2{l}": g2, f"be2{l}": be2})
    wslab = _pack_slab(wdict, _W_ENTRIES, W_OFF, W_ROWS, jnp.bfloat16)
    fslab = _pack_slab(fdict, _F_ENTRIES, F_OFF, F_ROWS, jnp.float32)
    return wslab, fslab


# --------------------------------------------------------------------------
# Jitted hot path: one tiny one_hot + ONE pallas_call (no grid, VMEM resident)
# --------------------------------------------------------------------------
@jax.jit
def forward_pallas(src_tokens, wslab, fslab):
    # one-hot built in the wrapper (review item); OOB token ids map to a zero
    # embedding instead of erroring like nn.Embedding.
    onehot = jax.nn.one_hot(src_tokens.reshape(-1), NUM_TOKENS, dtype=jnp.bfloat16)
    out = pl.pallas_call(
        fused_forward_kernel,
        out_shape=jax.ShapeDtypeStruct((BS, NUM_TOKENS), jnp.float32),
        in_specs=[pl.BlockSpec(memory_space=pltpu.MemorySpace.VMEM)] * 3,
        out_specs=pl.BlockSpec(memory_space=pltpu.MemorySpace.VMEM),
    )(onehot, wslab, fslab)
    return out.reshape(BATCH, SEQ, NUM_TOKENS)


# --------------------------------------------------------------------------
# Parameters and positional encoding
# --------------------------------------------------------------------------
def positional_encoding(max_len, d_model):
    position = jnp.arange(max_len, dtype=jnp.float32)[:, None]
    div_term = jnp.exp(jnp.arange(0, d_model, 2, dtype=jnp.float32)
                       * (-math.log(10000.0) / d_model))
    pe = jnp.zeros((max_len, d_model), jnp.float32)
    pe = pe.at[:, 0::2].set(jnp.sin(position * div_term))
    pe = pe.at[:, 1::2].set(jnp.cos(position * div_term))
    return pe[None]  # (1, max_len, d_model)


def init_params(key):
    keys = jax.random.split(key, 2 + NUM_LAYERS)
    emb = jax.random.uniform(keys[0], (NUM_TOKENS, D_MODEL), jnp.float32, -0.1, 0.1)
    dec_w = jax.random.uniform(keys[1], (NUM_TOKENS, D_MODEL), jnp.float32, -0.1, 0.1)
    dec_b = jnp.zeros((1, NUM_TOKENS), jnp.float32)

    layers = []
    for i in range(NUM_LAYERS):
        k = jax.random.split(keys[2 + i], 8)
        wqkv = jax.random.normal(k[0], (3 * D_MODEL, D_MODEL), jnp.float32) / math.sqrt(D_MODEL)
        bqkv = 0.02 * jax.random.normal(k[1], (1, 3 * D_MODEL), jnp.float32)
        wo = jax.random.normal(k[2], (D_MODEL, D_MODEL), jnp.float32) / math.sqrt(D_MODEL)
        bo = 0.02 * jax.random.normal(k[3], (1, D_MODEL), jnp.float32)
        g1 = jnp.ones((1, D_MODEL), jnp.float32)
        be1 = jnp.zeros((1, D_MODEL), jnp.float32)
        w1 = jax.random.normal(k[4], (DIM_FF, D_MODEL), jnp.float32) / math.sqrt(D_MODEL)
        b1 = 0.02 * jax.random.normal(k[5], (1, DIM_FF), jnp.float32)
        w2 = jax.random.normal(k[6], (D_MODEL, DIM_FF), jnp.float32) / math.sqrt(DIM_FF)
        b2 = 0.02 * jax.random.normal(k[7], (1, D_MODEL), jnp.float32)
        g2 = jnp.ones((1, D_MODEL), jnp.float32)
        be2 = jnp.zeros((1, D_MODEL), jnp.float32)
        layers.append((wqkv, bqkv, wo, bo, g1, be1, w1, b1, w2, b2, g2, be2))
    return emb, dec_w, dec_b, layers


# --------------------------------------------------------------------------
# Pure-JAX f32 reference (same math as the PyTorch module) for verification
# --------------------------------------------------------------------------
def _ref_layer_norm(x, gamma, beta):
    mean = jnp.mean(x, axis=-1, keepdims=True)
    var = jnp.mean((x - mean) ** 2, axis=-1, keepdims=True)
    return (x - mean) * jax.lax.rsqrt(var + LN_EPS) * gamma + beta


def ref_encoder_layer(x, params):
    wqkv, bqkv, wo, bo, g1, be1, w1, b1, w2, b2, g2, be2 = params
    qkv = x @ wqkv.T + bqkv
    q, k, v = jnp.split(qkv, 3, axis=-1)

    def heads(t):
        return t.reshape(BATCH, SEQ, NHEAD, HEAD_DIM).transpose(0, 2, 1, 3)

    qh, kh, vh = heads(q), heads(k), heads(v)
    s = jnp.einsum('bhqd,bhkd->bhqk', qh, kh) / math.sqrt(HEAD_DIM)
    p = jax.nn.softmax(s, axis=-1)
    ctx = jnp.einsum('bhqk,bhkd->bhqd', p, vh).transpose(0, 2, 1, 3).reshape(BATCH, SEQ, D_MODEL)
    attn = ctx @ wo.T + bo
    x1 = _ref_layer_norm(x + attn, g1, be1)
    ff = jnp.maximum(x1 @ w1.T + b1, 0.0) @ w2.T + b2
    return _ref_layer_norm(x1 + ff, g2, be2)


def forward_ref(src_tokens, emb, dec_w, dec_b, layers, pe):
    x = emb[src_tokens] + pe[:, :src_tokens.shape[1], :]
    for params in layers:
        x = ref_encoder_layer(x, params)
    return x @ dec_w.T + dec_b


if __name__ == "__main__":
    key = jax.random.PRNGKey(0)
    kp, kt = jax.random.split(key)
    emb, dec_w, dec_b, layers = init_params(kp)
    pe = positional_encoding(SEQ, D_MODEL)

    src = jax.random.randint(kt, (BATCH, SEQ), 0, NUM_TOKENS)   # token ids

    # one-time packing (hoisted out of the per-call path)
    wslab, fslab = pack_params(emb, dec_w, dec_b, layers, pe)

    out = forward_pallas(src, wslab, fslab)
    out = jax.block_until_ready(out)

    ref = forward_ref(src, emb, dec_w, dec_b, layers, pe)
    assert out.shape == (BATCH, SEQ, NUM_TOKENS)
    # bf16 MXU inputs (per perf review) + approx softmax reciprocal cause a
    # small, expected deviation (~1e-2 abs) from the f32 reference.
    assert jnp.allclose(out, ref, rtol=4e-2, atol=4e-2), "Pallas output mismatch vs reference"

    print("KERNEL_OK")
</pallas_src>

<mosaic_0001>
module attributes {stable_mosaic.version = 11 : i64} {
  func.func @fused_forward_kernel(%arg0: memref<16x16xbf16, #tpu.memory_space<vmem>>, %arg1: memref<368x128xbf16, #tpu.memory_space<vmem>>, %arg2: memref<216x128xf32, #tpu.memory_space<vmem>>, %arg3: memref<16x16xf32, #tpu.memory_space<vmem>>) attributes {dimension_semantics = [], scalar_prefetch = 0 : i64, scratch_operands = 0 : i64, tpu.core_type = #tpu.core_type<tc>} {
    %c0 = arith.constant 0 : index
    %c0_0 = arith.constant 0 : index
    %0 = vector.load %arg0[%c0, %c0_0] : memref<16x16xbf16, #tpu.memory_space<vmem>>, vector<16x16xbf16>
    %c0_1 = arith.constant 0 : index
    %c0_2 = arith.constant 0 : index
    %1 = vector.load %arg1[%c0_1, %c0_2] : memref<368x128xbf16, #tpu.memory_space<vmem>>, vector<16x32xbf16>
    %cst = arith.constant dense<0.000000e+00> : vector<16x32xf32>
    %2 = tpu.matmul %0, %1, %cst {dimension_numbers = #tpu.dot_dimension_numbers<[1], [0], [0], [1], [0, 0, 1, 1], [], []>} : vector<16x16xbf16>, vector<16x32xbf16>, vector<16x32xf32> -> vector<16x32xf32>
    %c0_3 = arith.constant 0 : index
    %c0_4 = arith.constant 0 : index
    %3 = vector.load %arg2[%c0_3, %c0_4] : memref<216x128xf32, #tpu.memory_space<vmem>>, vector<16x32xf32>
    %4 = arith.addf %2, %3 : vector<16x32xf32>
    %c16 = arith.constant 16 : index
    %c0_5 = arith.constant 0 : index
    %5 = vector.load %arg2[%c16, %c0_5] : memref<216x128xf32, #tpu.memory_space<vmem>>, vector<64x64xf32>
    %6 = arith.truncf %4 : vector<16x32xf32> to vector<16x32xbf16>
    %c16_6 = arith.constant 16 : index
    %c0_7 = arith.constant 0 : index
    %7 = vector.load %arg1[%c16_6, %c0_7] : memref<368x128xbf16, #tpu.memory_space<vmem>>, vector<32x96xbf16>
    %cst_8 = arith.constant dense<0.000000e+00> : vector<16x96xf32>
    %8 = tpu.matmul %6, %7, %cst_8 {dimension_numbers = #tpu.dot_dimension_numbers<[1], [0], [0], [1], [0, 0, 1, 1], [], []>} : vector<16x32xbf16>, vector<32x96xbf16>, vector<16x96xf32> -> vector<16x96xf32>
    %c80 = arith.constant 80 : index
    %c0_9 = arith.constant 0 : index
    %9 = vector.load %arg2[%c80, %c0_9] : memref<216x128xf32, #tpu.memory_space<vmem>>, vector<1x96xf32>
    %10 = vector.broadcast %9 : vector<1x96xf32> to vector<16x96xf32>
    %11 = arith.addf %8, %10 : vector<16x96xf32>
    %12 = vector.extract_strided_slice %11 {offsets = [0, 0], sizes = [16, 8], strides = [1, 1]} : vector<16x96xf32> to vector<16x8xf32>
    %13 = vector.extract_strided_slice %11 {offsets = [0, 8], sizes = [16, 8], strides = [1, 1]} : vector<16x96xf32> to vector<16x8xf32>
    %14 = vector.extract_strided_slice %11 {offsets = [0, 16], sizes = [16, 8], strides = [1, 1]} : vector<16x96xf32> to vector<16x8xf32>
    %15 = vector.extract_strided_slice %11 {offsets = [0, 24], sizes = [16, 8], strides = [1, 1]} : vector<16x96xf32> to vector<16x8xf32>
    %16 = tpu.concatenate %12, %13, %14, %15 in 0 : vector<16x8xf32>, vector<16x8xf32>, vector<16x8xf32>, vector<16x8xf32> -> vector<64x8xf32>
    %17 = vector.extract_strided_slice %11 {offsets = [0, 32], sizes = [16, 8], strides = [1, 1]} : vector<16x96xf32> to vector<16x8xf32>
    %18 = vector.extract_strided_slice %11 {offsets = [0, 40], sizes = [16, 8], strides = [1, 1]} : vector<16x96xf32> to vector<16x8xf32>
    %19 = vector.extract_strided_slice %11 {offsets = [0, 48], sizes = [16, 8], strides = [1, 1]} : vector<16x96xf32> to vector<16x8xf32>
    %20 = vector.extract_strided_slice %11 {offsets = [0, 56], sizes = [16, 8], strides = [1, 1]} : vector<16x96xf32> to vector<16x8xf32>
    %21 = tpu.concatenate %17, %18, %19, %20 in 0 : vector<16x8xf32>, vector<16x8xf32>, vector<16x8xf32>, vector<16x8xf32> -> vector<64x8xf32>
    %22 = vector.extract_strided_slice %11 {offsets = [0, 64], sizes = [16, 8], strides = [1, 1]} : vector<16x96xf32> to vector<16x8xf32>
    %23 = vector.extract_strided_slice %11 {offsets = [0, 72], sizes = [16, 8], strides = [1, 1]} : vector<16x96xf32> to vector<16x8xf32>
    %24 = vector.extract_strided_slice %11 {offsets = [0, 80], sizes = [16, 8], strides = [1, 1]} : vector<16x96xf32> to vector<16x8xf32>
    %25 = vector.extract_strided_slice %11 {offsets = [0, 88], sizes = [16, 8], strides = [1, 1]} : vector<16x96xf32> to vector<16x8xf32>
    %26 = tpu.concatenate %22, %23, %24, %25 in 0 : vector<16x8xf32>, vector<16x8xf32>, vector<16x8xf32>, vector<16x8xf32> -> vector<64x8xf32>
    %27 = arith.truncf %16 : vector<64x8xf32> to vector<64x8xbf16>
    %28 = arith.truncf %21 : vector<64x8xf32> to vector<64x8xbf16>
    %cst_10 = arith.constant dense<0.000000e+00> : vector<64x64xf32>
    %29 = tpu.matmul %27, %28, %cst_10 {dimension_numbers = #tpu.dot_dimension_numbers<[1], [1], [0], [0], [0, 0, 1, 0], [], []>} : vector<64x8xbf16>, vector<64x8xbf16>, vector<64x64xf32> -> vector<64x64xf32>
    %30 = arith.addf %29, %5 : vector<64x64xf32>
    %cst_11 = arith.constant dense<0xFF800000> : vector<64xf32>
    %31 = vector.multi_reduction <maximumf>, %30, %cst_11 [1] : vector<64x64xf32> to vector<64xf32>
    %32 = vector.shape_cast %31 : vector<64xf32> to vector<64x1xf32>
    %33 = vector.broadcast %32 : vector<64x1xf32> to vector<64x64xf32>
    %34 = arith.subf %30, %33 : vector<64x64xf32>
    %35 = math.exp %34 : vector<64x64xf32>
    %cst_12 = arith.constant dense<0.000000e+00> : vector<64xf32>
    %36 = vector.multi_reduction <add>, %35, %cst_12 [1] : vector<64x64xf32> to vector<64xf32>
    %37 = vector.shape_cast %36 : vector<64xf32> to vector<64x1xf32>
    %38 = tpu.reciprocal %37 {approx = true} : vector<64x1xf32> -> vector<64x1xf32>
    %39 = vector.broadcast %38 : vector<64x1xf32> to vector<64x64xf32>
    %40 = arith.mulf %35, %39 : vector<64x64xf32>
    %41 = arith.truncf %40 : vector<64x64xf32> to vector<64x64xbf16>
    %42 = arith.truncf %26 : vector<64x8xf32> to vector<64x8xbf16>
    %cst_13 = arith.constant dense<0.000000e+00> : vector<64x8xf32>
    %43 = tpu.matmul %41, %42, %cst_13 {dimension_numbers = #tpu.dot_dimension_numbers<[1], [0], [0], [1], [0, 0, 1, 1], [], []>} : vector<64x64xbf16>, vector<64x8xbf16>, vector<64x8xf32> -> vector<64x8xf32>
    %c48 = arith.constant 48 : index
    %c0_14 = arith.constant 0 : index
    %44 = vector.load %arg1[%c48, %c0_14] : memref<368x128xbf16, #tpu.memory_space<vmem>>, vector<32x32xbf16>
    %cst_15 = arith.constant 0.000000e+00 : f32
    %45 = vector.broadcast %cst_15 : f32 to vector<16x32xf32>
    %46 = vector.extract_strided_slice %43 {offsets = [0, 0], sizes = [16, 8], strides = [1, 1]} : vector<64x8xf32> to vector<16x8xf32>
    %47 = arith.truncf %46 : vector<16x8xf32> to vector<16x8xbf16>
    %48 = vector.extract_strided_slice %44 {offsets = [0, 0], sizes = [8, 32], strides = [1, 1]} : vector<32x32xbf16> to vector<8x32xbf16>
    %cst_16 = arith.constant dense<0.000000e+00> : vector<16x32xf32>
    %49 = tpu.matmul %47, %48, %cst_16 {dimension_numbers = #tpu.dot_dimension_numbers<[1], [0], [0], [1], [0, 0, 1, 1], [], []>} : vector<16x8xbf16>, vector<8x32xbf16>, vector<16x32xf32> -> vector<16x32xf32>
    %50 = arith.addf %45, %49 : vector<16x32xf32>
    %51 = vector.extract_strided_slice %43 {offsets = [16, 0], sizes = [16, 8], strides = [1, 1]} : vector<64x8xf32> to vector<16x8xf32>
    %52 = arith.truncf %51 : vector<16x8xf32> to vector<16x8xbf16>
    %53 = vector.extract_strided_slice %44 {offsets = [8, 0], sizes = [8, 32], strides = [1, 1]} : vector<32x32xbf16> to vector<8x32xbf16>
    %cst_17 = arith.constant dense<0.000000e+00> : vector<16x32xf32>
    %54 = tpu.matmul %52, %53, %cst_17 {dimension_numbers = #tpu.dot_dimension_numbers<[1], [0], [0], [1], [0, 0, 1, 1], [], []>} : vector<16x8xbf16>, vector<8x32xbf16>, vector<16x32xf32> -> vector<16x32xf32>
    %55 = arith.addf %50, %54 : vector<16x32xf32>
    %56 = vector.extract_strided_slice %43 {offsets = [32, 0], sizes = [16, 8], strides = [1, 1]} : vector<64x8xf32> to vector<16x8xf32>
    %57 = arith.truncf %56 : vector<16x8xf32> to vector<16x8xbf16>
    %58 = vector.extract_strided_slice %44 {offsets = [16, 0], sizes = [8, 32], strides = [1, 1]} : vector<32x32xbf16> to vector<8x32xbf16>
    %cst_18 = arith.constant dense<0.000000e+00> : vector<16x32xf32>
    %59 = tpu.matmul %57, %58, %cst_18 {dimension_numbers = #tpu.dot_dimension_numbers<[1], [0], [0], [1], [0, 0, 1, 1], [], []>} : vector<16x8xbf16>, vector<8x32xbf16>, vector<16x32xf32> -> vector<16x32xf32>
    %60 = arith.addf %55, %59 : vector<16x32xf32>
    %61 = vector.extract_strided_slice %43 {offsets = [48, 0], sizes = [16, 8], strides = [1, 1]} : vector<64x8xf32> to vector<16x8xf32>
    %62 = arith.truncf %61 : vector<16x8xf32> to vector<16x8xbf16>
    %63 = vector.extract_strided_slice %44 {offsets = [24, 0], sizes = [8, 32], strides = [1, 1]} : vector<32x32xbf16> to vector<8x32xbf16>
    %cst_19 = arith.constant dense<0.000000e+00> : vector<16x32xf32>
    %64 = tpu.matmul %62, %63, %cst_19 {dimension_numbers = #tpu.dot_dimension_numbers<[1], [0], [0], [1], [0, 0, 1, 1], [], []>} : vector<16x8xbf16>, vector<8x32xbf16>, vector<16x32xf32> -> vector<16x32xf32>
    %65 = arith.addf %60, %64 : vector<16x32xf32>
    %c88 = arith.constant 88 : index
    %c0_20 = arith.constant 0 : index
    %66 = vector.load %arg2[%c88, %c0_20] : memref<216x128xf32, #tpu.memory_space<vmem>>, vector<1x32xf32>
    %67 = vector.broadcast %66 : vector<1x32xf32> to vector<16x32xf32>
    %68 = arith.addf %65, %67 : vector<16x32xf32>
    %69 = arith.addf %4, %68 : vector<16x32xf32>
    %c96 = arith.constant 96 : index
    %c0_21 = arith.constant 0 : index
    %70 = vector.load %arg2[%c96, %c0_21] : memref<216x128xf32, #tpu.memory_space<vmem>>, vector<1x32xf32>
    %c104 = arith.constant 104 : index
    %c0_22 = arith.constant 0 : index
    %71 = vector.load %arg2[%c104, %c0_22] : memref<216x128xf32, #tpu.memory_space<vmem>>, vector<1x32xf32>
    %cst_23 = arith.constant dense<0.000000e+00> : vector<16xf32>
    %72 = vector.multi_reduction <add>, %69, %cst_23 [1] : vector<16x32xf32> to vector<16xf32>
    %73 = vector.shape_cast %72 : vector<16xf32> to vector<16x1xf32>
    %cst_24 = arith.constant 3.125000e-02 : f32
    %74 = vector.broadcast %cst_24 : f32 to vector<16x1xf32>
    %75 = arith.mulf %73, %74 : vector<16x1xf32>
    %76 = arith.mulf %69, %69 : vector<16x32xf32>
    %cst_25 = arith.constant dense<0.000000e+00> : vector<16xf32>
    %77 = vector.multi_reduction <add>, %76, %cst_25 [1] : vector<16x32xf32> to vector<16xf32>
    %78 = vector.shape_cast %77 : vector<16xf32> to vector<16x1xf32>
    %cst_26 = arith.constant 3.125000e-02 : f32
    %79 = vector.broadcast %cst_26 : f32 to vector<16x1xf32>
    %80 = arith.mulf %78, %79 : vector<16x1xf32>
    %81 = arith.mulf %75, %75 : vector<16x1xf32>
    %82 = arith.subf %80, %81 : vector<16x1xf32>
    %83 = vector.broadcast %75 : vector<16x1xf32> to vector<16x32xf32>
    %84 = arith.subf %69, %83 : vector<16x32xf32>
    %cst_27 = arith.constant 9.99999974E-6 : f32
    %85 = vector.broadcast %cst_27 : f32 to vector<16x1xf32>
    %86 = arith.addf %82, %85 : vector<16x1xf32>
    %87 = math.rsqrt %86 : vector<16x1xf32>
    %88 = vector.broadcast %87 : vector<16x1xf32> to vector<16x32xf32>
    %89 = arith.mulf %84, %88 : vector<16x32xf32>
    %90 = vector.broadcast %70 : vector<1x32xf32> to vector<16x32xf32>
    %91 = arith.mulf %89, %90 : vector<16x32xf32>
    %92 = vector.broadcast %71 : vector<1x32xf32> to vector<16x32xf32>
    %93 = arith.addf %91, %92 : vector<16x32xf32>
    %94 = arith.truncf %93 : vector<16x32xf32> to vector<16x32xbf16>
    %c80_28 = arith.constant 80 : index
    %c0_29 = arith.constant 0 : index
    %95 = vector.load %arg1[%c80_28, %c0_29] : memref<368x128xbf16, #tpu.memory_space<vmem>>, vector<32x64xbf16>
    %cst_30 = arith.constant dense<0.000000e+00> : vector<16x64xf32>
    %96 = tpu.matmul %94, %95, %cst_30 {dimension_numbers = #tpu.dot_dimension_numbers<[1], [0], [0], [1], [0, 0, 1, 1], [], []>} : vector<16x32xbf16>, vector<32x64xbf16>, vector<16x64xf32> -> vector<16x64xf32>
    %c112 = arith.constant 112 : index
    %c0_31 = arith.constant 0 : index
    %97 = vector.load %arg2[%c112, %c0_31] : memref<216x128xf32, #tpu.memory_space<vmem>>, vector<1x64xf32>
    %98 = vector.broadcast %97 : vector<1x64xf32> to vector<16x64xf32>
    %99 = arith.addf %96, %98 : vector<16x64xf32>
    %cst_32 = arith.constant 0.000000e+00 : f32
    %100 = vector.broadcast %cst_32 : f32 to vector<16x64xf32>
    %101 = arith.maximumf %99, %100 : vector<16x64xf32>
    %102 = arith.truncf %101 : vector<16x64xf32> to vector<16x64xbf16>
    %c112_33 = arith.constant 112 : index
    %c0_34 = arith.constant 0 : index
    %103 = vector.load %arg1[%c112_33, %c0_34] : memref<368x128xbf16, #tpu.memory_space<vmem>>, vector<64x32xbf16>
    %cst_35 = arith.constant dense<0.000000e+00> : vector<16x32xf32>
    %104 = tpu.matmul %102, %103, %cst_35 {dimension_numbers = #tpu.dot_dimension_numbers<[1], [0], [0], [1], [0, 0, 1, 1], [], []>} : vector<16x64xbf16>, vector<64x32xbf16>, vector<16x32xf32> -> vector<16x32xf32>
    %c120 = arith.constant 120 : index
    %c0_36 = arith.constant 0 : index
    %105 = vector.load %arg2[%c120, %c0_36] : memref<216x128xf32, #tpu.memory_space<vmem>>, vector<1x32xf32>
    %106 = vector.broadcast %105 : vector<1x32xf32> to vector<16x32xf32>
    %107 = arith.addf %104, %106 : vector<16x32xf32>
    %108 = arith.addf %93, %107 : vector<16x32xf32>
    %c128 = arith.constant 128 : index
    %c0_37 = arith.constant 0 : index
    %109 = vector.load %arg2[%c128, %c0_37] : memref<216x128xf32, #tpu.memory_space<vmem>>, vector<1x32xf32>
    %c136 = arith.constant 136 : index
    %c0_38 = arith.constant 0 : index
    %110 = vector.load %arg2[%c136, %c0_38] : memref<216x128xf32, #tpu.memory_space<vmem>>, vector<1x32xf32>
    %cst_39 = arith.constant dense<0.000000e+00> : vector<16xf32>
    %111 = vector.multi_reduction <add>, %108, %cst_39 [1] : vector<16x32xf32> to vector<16xf32>
    %112 = vector.shape_cast %111 : vector<16xf32> to vector<16x1xf32>
    %cst_40 = arith.constant 3.125000e-02 : f32
    %113 = vector.broadcast %cst_40 : f32 to vector<16x1xf32>
    %114 = arith.mulf %112, %113 : vector<16x1xf32>
    %115 = arith.mulf %108, %108 : vector<16x32xf32>
    %cst_41 = arith.constant dense<0.000000e+00> : vector<16xf32>
    %116 = vector.multi_reduction <add>, %115, %cst_41 [1] : vector<16x32xf32> to vector<16xf32>
    %117 = vector.shape_cast %116 : vector<16xf32> to vector<16x1xf32>
    %cst_42 = arith.constant 3.125000e-02 : f32
    %118 = vector.broadcast %cst_42 : f32 to vector<16x1xf32>
    %119 = arith.mulf %117, %118 : vector<16x1xf32>
    %120 = arith.mulf %114, %114 : vector<16x1xf32>
    %121 = arith.subf %119, %120 : vector<16x1xf32>
    %122 = vector.broadcast %114 : vector<16x1xf32> to vector<16x32xf32>
    %123 = arith.subf %108, %122 : vector<16x32xf32>
    %cst_43 = arith.constant 9.99999974E-6 : f32
    %124 = vector.broadcast %cst_43 : f32 to vector<16x1xf32>
    %125 = arith.addf %121, %124 : vector<16x1xf32>
    %126 = math.rsqrt %125 : vector<16x1xf32>
    %127 = vector.broadcast %126 : vector<16x1xf32> to vector<16x32xf32>
    %128 = arith.mulf %123, %127 : vector<16x32xf32>
    %129 = vector.broadcast %109 : vector<1x32xf32> to vector<16x32xf32>
    %130 = arith.mulf %128, %129 : vector<16x32xf32>
    %131 = vector.broadcast %110 : vector<1x32xf32> to vector<16x32xf32>
    %132 = arith.addf %130, %131 : vector<16x32xf32>
    %133 = arith.truncf %132 : vector<16x32xf32> to vector<16x32xbf16>
    %c176 = arith.constant 176 : index
    %c0_44 = arith.constant 0 : index
    %134 = vector.load %arg1[%c176, %c0_44] : memref<368x128xbf16, #tpu.memory_space<vmem>>, vector<32x96xbf16>
    %cst_45 = arith.constant dense<0.000000e+00> : vector<16x96xf32>
    %135 = tpu.matmul %133, %134, %cst_45 {dimension_numbers = #tpu.dot_dimension_numbers<[1], [0], [0], [1], [0, 0, 1, 1], [], []>} : vector<16x32xbf16>, vector<32x96xbf16>, vector<16x96xf32> -> vector<16x96xf32>
    %c144 = arith.constant 144 : index
    %c0_46 = arith.constant 0 : index
    %136 = vector.load %arg2[%c144, %c0_46] : memref<216x128xf32, #tpu.memory_space<vmem>>, vector<1x96xf32>
    %137 = vector.broadcast %136 : vector<1x96xf32> to vector<16x96xf32>
    %138 = arith.addf %135, %137 : vector<16x96xf32>
    %139 = vector.extract_strided_slice %138 {offsets = [0, 0], sizes = [16, 8], strides = [1, 1]} : vector<16x96xf32> to vector<16x8xf32>
    %140 = vector.extract_strided_slice %138 {offsets = [0, 8], sizes = [16, 8], strides = [1, 1]} : vector<16x96xf32> to vector<16x8xf32>
    %141 = vector.extract_strided_slice %138 {offsets = [0, 16], sizes = [16, 8], strides = [1, 1]} : vector<16x96xf32> to vector<16x8xf32>
    %142 = vector.extract_strided_slice %138 {offsets = [0, 24], sizes = [16, 8], strides = [1, 1]} : vector<16x96xf32> to vector<16x8xf32>
    %143 = tpu.concatenate %139, %140, %141, %142 in 0 : vector<16x8xf32>, vector<16x8xf32>, vector<16x8xf32>, vector<16x8xf32> -> vector<64x8xf32>
    %144 = vector.extract_strided_slice %138 {offsets = [0, 32], sizes = [16, 8], strides = [1, 1]} : vector<16x96xf32> to vector<16x8xf32>
    %145 = vector.extract_strided_slice %138 {offsets = [0, 40], sizes = [16, 8], strides = [1, 1]} : vector<16x96xf32> to vector<16x8xf32>
    %146 = vector.extract_strided_slice %138 {offsets = [0, 48], sizes = [16, 8], strides = [1, 1]} : vector<16x96xf32> to vector<16x8xf32>
    %147 = vector.extract_strided_slice %138 {offsets = [0, 56], sizes = [16, 8], strides = [1, 1]} : vector<16x96xf32> to vector<16x8xf32>
    %148 = tpu.concatenate %144, %145, %146, %147 in 0 : vector<16x8xf32>, vector<16x8xf32>, vector<16x8xf32>, vector<16x8xf32> -> vector<64x8xf32>
    %149 = vector.extract_strided_slice %138 {offsets = [0, 64], sizes = [16, 8], strides = [1, 1]} : vector<16x96xf32> to vector<16x8xf32>
    %150 = vector.extract_strided_slice %138 {offsets = [0, 72], sizes = [16, 8], strides = [1, 1]} : vector<16x96xf32> to vector<16x8xf32>
    %151 = vector.extract_strided_slice %138 {offsets = [0, 80], sizes = [16, 8], strides = [1, 1]} : vector<16x96xf32> to vector<16x8xf32>
    %152 = vector.extract_strided_slice %138 {offsets = [0, 88], sizes = [16, 8], strides = [1, 1]} : vector<16x96xf32> to vector<16x8xf32>
    %153 = tpu.concatenate %149, %150, %151, %152 in 0 : vector<16x8xf32>, vector<16x8xf32>, vector<16x8xf32>, vector<16x8xf32> -> vector<64x8xf32>
    %154 = arith.truncf %143 : vector<64x8xf32> to vector<64x8xbf16>
    %155 = arith.truncf %148 : vector<64x8xf32> to vector<64x8xbf16>
    %cst_47 = arith.constant dense<0.000000e+00> : vector<64x64xf32>
    %156 = tpu.matmul %154, %155, %cst_47 {dimension_numbers = #tpu.dot_dimension_numbers<[1], [1], [0], [0], [0, 0, 1, 0], [], []>} : vector<64x8xbf16>, vector<64x8xbf16>, vector<64x64xf32> -> vector<64x64xf32>
    %157 = arith.addf %156, %5 : vector<64x64xf32>
    %cst_48 = arith.constant dense<0xFF800000> : vector<64xf32>
    %158 = vector.multi_reduction <maximumf>, %157, %cst_48 [1] : vector<64x64xf32> to vector<64xf32>
    %159 = vector.shape_cast %158 : vector<64xf32> to vector<64x1xf32>
    %160 = vector.broadcast %159 : vector<64x1xf32> to vector<64x64xf32>
    %161 = arith.subf %157, %160 : vector<64x64xf32>
    %162 = math.exp %161 : vector<64x64xf32>
    %cst_49 = arith.constant dense<0.000000e+00> : vector<64xf32>
    %163 = vector.multi_reduction <add>, %162, %cst_49 [1] : vector<64x64xf32> to vector<64xf32>
    %164 = vector.shape_cast %163 : vector<64xf32> to vector<64x1xf32>
    %165 = tpu.reciprocal %164 {approx = true} : vector<64x1xf32> -> vector<64x1xf32>
    %166 = vector.broadcast %165 : vector<64x1xf32> to vector<64x64xf32>
    %167 = arith.mulf %162, %166 : vector<64x64xf32>
    %168 = arith.truncf %167 : vector<64x64xf32> to vector<64x64xbf16>
    %169 = arith.truncf %153 : vector<64x8xf32> to vector<64x8xbf16>
    %cst_50 = arith.constant dense<0.000000e+00> : vector<64x8xf32>
    %170 = tpu.matmul %168, %169, %cst_50 {dimension_numbers = #tpu.dot_dimension_numbers<[1], [0], [0], [1], [0, 0, 1, 1], [], []>} : vector<64x64xbf16>, vector<64x8xbf16>, vector<64x8xf32> -> vector<64x8xf32>
    %c208 = arith.constant 208 : index
    %c0_51 = arith.constant 0 : index
    %171 = vector.load %arg1[%c208, %c0_51] : memref<368x128xbf16, #tpu.memory_space<vmem>>, vector<32x32xbf16>
    %cst_52 = arith.constant 0.000000e+00 : f32
    %172 = vector.broadcast %cst_52 : f32 to vector<16x32xf32>
    %173 = vector.extract_strided_slice %170 {offsets = [0, 0], sizes = [16, 8], strides = [1, 1]} : vector<64x8xf32> to vector<16x8xf32>
    %174 = arith.truncf %173 : vector<16x8xf32> to vector<16x8xbf16>
    %175 = vector.extract_strided_slice %171 {offsets = [0, 0], sizes = [8, 32], strides = [1, 1]} : vector<32x32xbf16> to vector<8x32xbf16>
    %cst_53 = arith.constant dense<0.000000e+00> : vector<16x32xf32>
    %176 = tpu.matmul %174, %175, %cst_53 {dimension_numbers = #tpu.dot_dimension_numbers<[1], [0], [0], [1], [0, 0, 1, 1], [], []>} : vector<16x8xbf16>, vector<8x32xbf16>, vector<16x32xf32> -> vector<16x32xf32>
    %177 = arith.addf %172, %176 : vector<16x32xf32>
    %178 = vector.extract_strided_slice %170 {offsets = [16, 0], sizes = [16, 8], strides = [1, 1]} : vector<64x8xf32> to vector<16x8xf32>
    %179 = arith.truncf %178 : vector<16x8xf32> to vector<16x8xbf16>
    %180 = vector.extract_strided_slice %171 {offsets = [8, 0], sizes = [8, 32], strides = [1, 1]} : vector<32x32xbf16> to vector<8x32xbf16>
    %cst_54 = arith.constant dense<0.000000e+00> : vector<16x32xf32>
    %181 = tpu.matmul %179, %180, %cst_54 {dimension_numbers = #tpu.dot_dimension_numbers<[1], [0], [0], [1], [0, 0, 1, 1], [], []>} : vector<16x8xbf16>, vector<8x32xbf16>, vector<16x32xf32> -> vector<16x32xf32>
    %182 = arith.addf %177, %181 : vector<16x32xf32>
    %183 = vector.extract_strided_slice %170 {offsets = [32, 0], sizes = [16, 8], strides = [1, 1]} : vector<64x8xf32> to vector<16x8xf32>
    %184 = arith.truncf %183 : vector<16x8xf32> to vector<16x8xbf16>
    %185 = vector.extract_strided_slice %171 {offsets = [16, 0], sizes = [8, 32], strides = [1, 1]} : vector<32x32xbf16> to vector<8x32xbf16>
    %cst_55 = arith.constant dense<0.000000e+00> : vector<16x32xf32>
    %186 = tpu.matmul %184, %185, %cst_55 {dimension_numbers = #tpu.dot_dimension_numbers<[1], [0], [0], [1], [0, 0, 1, 1], [], []>} : vector<16x8xbf16>, vector<8x32xbf16>, vector<16x32xf32> -> vector<16x32xf32>
    %187 = arith.addf %182, %186 : vector<16x32xf32>
    %188 = vector.extract_strided_slice %170 {offsets = [48, 0], sizes = [16, 8], strides = [1, 1]} : vector<64x8xf32> to vector<16x8xf32>
    %189 = arith.truncf %188 : vector<16x8xf32> to vector<16x8xbf16>
    %190 = vector.extract_strided_slice %171 {offsets = [24, 0], sizes = [8, 32], strides = [1, 1]} : vector<32x32xbf16> to vector<8x32xbf16>
    %cst_56 = arith.constant dense<0.000000e+00> : vector<16x32xf32>
    %191 = tpu.matmul %189, %190, %cst_56 {dimension_numbers = #tpu.dot_dimension_numbers<[1], [0], [0], [1], [0, 0, 1, 1], [], []>} : vector<16x8xbf16>, vector<8x32xbf16>, vector<16x32xf32> -> vector<16x32xf32>
    %192 = arith.addf %187, %191 : vector<16x32xf32>
    %c152 = arith.constant 152 : index
    %c0_57 = arith.constant 0 : index
    %193 = vector.load %arg2[%c152, %c0_57] : memref<216x128xf32, #tpu.memory_space<vmem>>, vector<1x32xf32>
    %194 = vector.broadcast %193 : vector<1x32xf32> to vector<16x32xf32>
    %195 = arith.addf %192, %194 : vector<16x32xf32>
    %196 = arith.addf %132, %195 : vector<16x32xf32>
    %c160 = arith.constant 160 : index
    %c0_58 = arith.constant 0 : index
    %197 = vector.load %arg2[%c160, %c0_58] : memref<216x128xf32, #tpu.memory_space<vmem>>, vector<1x32xf32>
    %c168 = arith.constant 168 : index
    %c0_59 = arith.constant 0 : index
    %198 = vector.load %arg2[%c168, %c0_59] : memref<216x128xf32, #tpu.memory_space<vmem>>, vector<1x32xf32>
    %cst_60 = arith.constant dense<0.000000e+00> : vector<16xf32>
    %199 = vector.multi_reduction <add>, %196, %cst_60 [1] : vector<16x32xf32> to vector<16xf32>
    %200 = vector.shape_cast %199 : vector<16xf32> to vector<16x1xf32>
    %cst_61 = arith.constant 3.125000e-02 : f32
    %201 = vector.broadcast %cst_61 : f32 to vector<16x1xf32>
    %202 = arith.mulf %200, %201 : vector<16x1xf32>
    %203 = arith.mulf %196, %196 : vector<16x32xf32>
    %cst_62 = arith.constant dense<0.000000e+00> : vector<16xf32>
    %204 = vector.multi_reduction <add>, %203, %cst_62 [1] : vector<16x32xf32> to vector<16xf32>
    %205 = vector.shape_cast %204 : vector<16xf32> to vector<16x1xf32>
    %cst_63 = arith.constant 3.125000e-02 : f32
    %206 = vector.broadcast %cst_63 : f32 to vector<16x1xf32>
    %207 = arith.mulf %205, %206 : vector<16x1xf32>
    %208 = arith.mulf %202, %202 : vector<16x1xf32>
    %209 = arith.subf %207, %208 : vector<16x1xf32>
    %210 = vector.broadcast %202 : vector<16x1xf32> to vector<16x32xf32>
    %211 = arith.subf %196, %210 : vector<16x32xf32>
    %cst_64 = arith.constant 9.99999974E-6 : f32
    %212 = vector.broadcast %cst_64 : f32 to vector<16x1xf32>
    %213 = arith.addf %209, %212 : vector<16x1xf32>
    %214 = math.rsqrt %213 : vector<16x1xf32>
    %215 = vector.broadcast %214 : vector<16x1xf32> to vector<16x32xf32>
    %216 = arith.mulf %211, %215 : vector<16x32xf32>
    %217 = vector.broadcast %197 : vector<1x32xf32> to vector<16x32xf32>
    %218 = arith.mulf %216, %217 : vector<16x32xf32>
    %219 = vector.broadcast %198 : vector<1x32xf32> to vector<16x32xf32>
    %220 = arith.addf %218, %219 : vector<16x32xf32>
    %221 = arith.truncf %220 : vector<16x32xf32> to vector<16x32xbf16>
    %c240 = arith.constant 240 : index
    %c0_65 = arith.constant 0 : index
    %222 = vector.load %arg1[%c240, %c0_65] : memref<368x128xbf16, #tpu.memory_space<vmem>>, vector<32x64xbf16>
    %cst_66 = arith.constant dense<0.000000e+00> : vector<16x64xf32>
    %223 = tpu.matmul %221, %222, %cst_66 {dimension_numbers = #tpu.dot_dimension_numbers<[1], [0], [0], [1], [0, 0, 1, 1], [], []>} : vector<16x32xbf16>, vector<32x64xbf16>, vector<16x64xf32> -> vector<16x64xf32>
    %c176_67 = arith.constant 176 : index
    %c0_68 = arith.constant 0 : index
    %224 = vector.load %arg2[%c176_67, %c0_68] : memref<216x128xf32, #tpu.memory_space<vmem>>, vector<1x64xf32>
    %225 = vector.broadcast %224 : vector<1x64xf32> to vector<16x64xf32>
    %226 = arith.addf %223, %225 : vector<16x64xf32>
    %cst_69 = arith.constant 0.000000e+00 : f32
    %227 = vector.broadcast %cst_69 : f32 to vector<16x64xf32>
    %228 = arith.maximumf %226, %227 : vector<16x64xf32>
    %229 = arith.truncf %228 : vector<16x64xf32> to vector<16x64xbf16>
    %c272 = arith.constant 272 : index
    %c0_70 = arith.constant 0 : index
    %230 = vector.load %arg1[%c272, %c0_70] : memref<368x128xbf16, #tpu.memory_space<vmem>>, vector<64x32xbf16>
    %cst_71 = arith.constant dense<0.000000e+00> : vector<16x32xf32>
    %231 = tpu.matmul %229, %230, %cst_71 {dimension_numbers = #tpu.dot_dimension_numbers<[1], [0], [0], [1], [0, 0, 1, 1], [], []>} : vector<16x64xbf16>, vector<64x32xbf16>, vector<16x32xf32> -> vector<16x32xf32>
    %c184 = arith.constant 184 : index
    %c0_72 = arith.constant 0 : index
    %232 = vector.load %arg2[%c184, %c0_72] : memref<216x128xf32, #tpu.memory_space<vmem>>, vector<1x32xf32>
    %233 = vector.broadcast %232 : vector<1x32xf32> to vector<16x32xf32>
    %234 = arith.addf %231, %233 : vector<16x32xf32>
    %235 = arith.addf %220, %234 : vector<16x32xf32>
    %c192 = arith.constant 192 : index
    %c0_73 = arith.constant 0 : index
    %236 = vector.load %arg2[%c192, %c0_73] : memref<216x128xf32, #tpu.memory_space<vmem>>, vector<1x32xf32>
    %c200 = arith.constant 200 : index
    %c0_74 = arith.constant 0 : index
    %237 = vector.load %arg2[%c200, %c0_74] : memref<216x128xf32, #tpu.memory_space<vmem>>, vector<1x32xf32>
    %cst_75 = arith.constant dense<0.000000e+00> : vector<16xf32>
    %238 = vector.multi_reduction <add>, %235, %cst_75 [1] : vector<16x32xf32> to vector<16xf32>
    %239 = vector.shape_cast %238 : vector<16xf32> to vector<16x1xf32>
    %cst_76 = arith.constant 3.125000e-02 : f32
    %240 = vector.broadcast %cst_76 : f32 to vector<16x1xf32>
    %241 = arith.mulf %239, %240 : vector<16x1xf32>
    %242 = arith.mulf %235, %235 : vector<16x32xf32>
    %cst_77 = arith.constant dense<0.000000e+00> : vector<16xf32>
    %243 = vector.multi_reduction <add>, %242, %cst_77 [1] : vector<16x32xf32> to vector<16xf32>
    %244 = vector.shape_cast %243 : vector<16xf32> to vector<16x1xf32>
    %cst_78 = arith.constant 3.125000e-02 : f32
    %245 = vector.broadcast %cst_78 : f32 to vector<16x1xf32>
    %246 = arith.mulf %244, %245 : vector<16x1xf32>
    %247 = arith.mulf %241, %241 : vector<16x1xf32>
    %248 = arith.subf %246, %247 : vector<16x1xf32>
    %249 = vector.broadcast %241 : vector<16x1xf32> to vector<16x32xf32>
    %250 = arith.subf %235, %249 : vector<16x32xf32>
    %cst_79 = arith.constant 9.99999974E-6 : f32
    %251 = vector.broadcast %cst_79 : f32 to vector<16x1xf32>
    %252 = arith.addf %248, %251 : vector<16x1xf32>
    %253 = math.rsqrt %252 : vector<16x1xf32>
    %254 = vector.broadcast %253 : vector<16x1xf32> to vector<16x32xf32>
    %255 = arith.mulf %250, %254 : vector<16x32xf32>
    %256 = vector.broadcast %236 : vector<1x32xf32> to vector<16x32xf32>
    %257 = arith.mulf %255, %256 : vector<16x32xf32>
    %258 = vector.broadcast %237 : vector<1x32xf32> to vector<16x32xf32>
    %259 = arith.addf %257, %258 : vector<16x32xf32>
    %260 = arith.truncf %259 : vector<16x32xf32> to vector<16x32xbf16>
    %c336 = arith.constant 336 : index
    %c0_80 = arith.constant 0 : index
    %261 = vector.load %arg1[%c336, %c0_80] : memref<368x128xbf16, #tpu.memory_space<vmem>>, vector<32x16xbf16>
    %cst_81 = arith.constant dense<0.000000e+00> : vector<16x16xf32>
    %262 = tpu.matmul %260, %261, %cst_81 {dimension_numbers = #tpu.dot_dimension_numbers<[1], [0], [0], [1], [0, 0, 1, 1], [], []>} : vector<16x32xbf16>, vector<32x16xbf16>, vector<16x16xf32> -> vector<16x16xf32>
    %c208_82 = arith.constant 208 : index
    %c0_83 = arith.constant 0 : index
    %263 = vector.load %arg2[%c208_82, %c0_83] : memref<216x128xf32, #tpu.memory_space<vmem>>, vector<1x16xf32>
    %264 = vector.broadcast %263 : vector<1x16xf32> to vector<16x16xf32>
    %265 = arith.addf %262, %264 : vector<16x16xf32>
    %c0_84 = arith.constant 0 : index
    %c0_85 = arith.constant 0 : index
    %266 = vector.load %arg3[%c0_84, %c0_85] : memref<16x16xf32, #tpu.memory_space<vmem>>, vector<16x16xf32>
    tpu.vector_store %arg3[%c0_84, %c0_85], %265 {strides = array<i32>} : memref<16x16xf32, #tpu.memory_space<vmem>>, vector<16x16xf32>,
    return
  }
}

</mosaic_0001>

<llo_original>
// kernel: eq.1
$region0: #{eq.1}
  %s0 = inlined_call_operand.hbm [shape: s32[2,8], index: 0, kind: input, shape index: {}]
  %s1 = inlined_call_operand.vmem [shape: s32[16], index: 1, kind: output, shape index: {}]
  $region1: #{eq.1} parent=0
    #allocation0 [shape = 'u8[1024]{0}', space=vmem, size = 0x400, scoped, tag = 'operand span for operand 0']
    #allocation1 [shape = 's32[1]{0}', space=sflag, size = 0x4, scoped, tag = 'scoped memory for eq.1']
    #allocation2 [shape = 'u8[4096]{0}', space=vmem, size = 0x1000, scoped, tag = 'scoped mem for output reshape']
    #allocation3 [shape = 'u8[4096]{0}', space=vmem, size = 0x1000, scoped, tag = 'scoped mem for input reshape']
    %2 = vsyncpa [#allocation1], 0
    %s4 = ssub.s32 32, 32
    %5 = vsyncadd [#allocation1], %s4
    %s7 = sshll.u32 [#allocation0], 4
    %s8 = int_to_ptr.vmem [resolvable:$true] %s7
    %10 = dma.hbm_to_vmem [thread:$0]  %s0, 32, %s8, [#allocation1]
    %11 = dma.done [#allocation1], 32
    %s13 = sshllo.u32 0, 2
    %v14 = vld [vmem:[#allocation0] sm:%s13]
    %15 = vst [vmem:[#allocation3] sm:%s13] %v14
    %v16 = vld [vmem:[#allocation3] sm:$0x1]
    %vm17 = vcmask 64512
    %18 = vst.msk [vmem:[#allocation2] sm:$0x1] %vm17, %v16
    %s19 = scalar_lea.vmem [#allocation3], 1
    %v20 = vld [vmem:[%s19] sm:$0x1]
    %21 = vrot.lane.b32.xlu0 %v20, 8
    %v22 = vpop.permute.xlu0 %21
    %vm23 = vcmask 130112
    %24 = vst.msk [vmem:[#allocation2] sm:$0x1] %vm23, %v22
    %s26 = sshllo.u32 0, 1
    %v28 = vld [vmem:[#allocation2] sm:%s26]
    %s29 = sshllo.u32 0, 1
    %30 = vst [vmem:[%s1] sm:%s29] %v28
    %31 = vsyncpa [#allocation1], 1

// kernel: forward_pallas.1
$region0: #{forward_pallas.1}
  #allocation0 [shape = 'u32[]', space=smem, size = 0x4, offset = 0x4, fixed_abs, tag = 'smem constant byte address 0x4 - core index']
  #allocation1 [shape = 'u32[144,128]{1,0:T(1,128)}', space=vmem, size = 0x12000, scoped, tag = 'internal scratch']
  %s0 = inlined_call_operand.vmem [shape: bf16[16,16], index: 0, kind: input, shape index: {}]
  %s1 = inlined_call_operand.hbm [shape: bf16[368,128], index: 1, kind: input, shape index: {}]
  %s2 = inlined_call_operand.hbm [shape: f32[216,128], index: 2, kind: input, shape index: {}]
  %s3 = inlined_call_operand.hbm [shape: f32[16,16], index: 3, kind: output, shape index: {}]
  %s4 = sld [smem:[#allocation0]]
  $region30: #{forward_pallas.1} parent=0
    _
  %s6 = ssub.s32 1, %s4
  %s7 = scalar_select 0, %s6, %s4
  $region1: #{forward_pallas.1} parent=0
    #allocation2 [shape = 'u8[94208]{0}', space=vmem, size = 0x17000, scoped, tag = 'input window, operand 1, single buffered']
    #allocation3 [shape = 's32[1]{0}', space=sflag, size = 0x4, scoped, tag = 'scoped memory for forward_pallas.1']
    #allocation4 [shape = 's32[1]{0}', space=sflag, size = 0x4, scoped, tag = 'scoped memory for forward_pallas.1']
    #allocation5 [shape = 'u8[110592]{0}', space=vmem, size = 0x1b000, scoped, tag = 'input window, operand 2, single buffered']
    #allocation6 [shape = 's32[1]{0}', space=sflag, size = 0x4, scoped, tag = 'scoped memory for forward_pallas.1']
    #allocation7 [shape = 'u8[8192]{0}', space=vmem, size = 0x2000, scoped, tag = 'output window, operand 0, single buffered']
    %8 = vsyncpa [#allocation3], 0
    %9 = vsyncpa [#allocation6], 0
    %10 = vsyncpa [#allocation4], 0
    // Predicated region
    $region2: #{forward_pallas.1} parent=1 // pred_check
      _
    $region3: #{forward_pallas.1} parent=1 // pred_check_branch
      %12 = sbr.rel (0) target = $region5
    $region4: #{forward_pallas.1} parent=1 // pred_region
      _
    $region5: #{forward_pallas.1} parent=1 // pred_fallthru
      _
    // Predicated region
    $region6: #{forward_pallas.1} parent=1 // pred_check
      _
    $region7: #{forward_pallas.1} parent=1 // pred_check_branch
      %14 = sbr.rel (0) target = $region9
    $region8: #{forward_pallas.1} parent=1 // pred_region
      %s16 = ssub.s32 2944, 2944
      %17 = vsyncadd [#allocation3], %s16
      %s18 = sshll.u32 [#allocation2], 4
      %s19 = int_to_ptr.vmem [resolvable:$true] %s18
      %24 = dma.hbm_to_vmem [thread:$0]  %s1, 2944, %s19, [#allocation3], 64, 64, 4
    $region9: #{forward_pallas.1} parent=1 // pred_fallthru
      _
    // Predicated region
    $region10: #{forward_pallas.1} parent=1 // pred_check
      _
    $region11: #{forward_pallas.1} parent=1 // pred_check_branch
      %26 = sbr.rel (0) target = $region13
    $region12: #{forward_pallas.1} parent=1 // pred_region
      %s28 = ssub.s32 3456, 3456
      %29 = vsyncadd [#allocation6], %s28
      %s30 = sshll.u32 [#allocation5], 4
      %s31 = int_to_ptr.vmem [resolvable:$true] %s30
      %36 = dma.hbm_to_vmem [thread:$0]  %s2, 3456, %s31, [#allocation6], 128, 128, 8
    $region13: #{forward_pallas.1} parent=1 // pred_fallthru
      _
    // Predicated region
    $region14: #{forward_pallas.1} parent=1 // pred_check
      _
    $region15: #{forward_pallas.1} parent=1 // pred_check_branch
      %38 = sbr.rel (0) target = $region17
    $region16: #{forward_pallas.1} parent=1 // pred_region
      %39 = dma.done [#allocation3], 2944
    $region17: #{forward_pallas.1} parent=1 // pred_fallthru
      _
    // Predicated region
    $region18: #{forward_pallas.1} parent=1 // pred_check
      _
    $region19: #{forward_pallas.1} parent=1 // pred_check_branch
      %41 = sbr.rel (0) target = $region21
    $region20: #{forward_pallas.1} parent=1 // pred_region
      %42 = dma.done [#allocation6], 3456
    $region21: #{forward_pallas.1} parent=1 // pred_fallthru
      _
    %v44 = vld [vmem:[%s0] sm:$0xf]
    %v45 = vld [vmem:[%s0 + $0x4] sm:$0xf]
    %v46 = vld [vmem:[#allocation2] sm:$0xf]
    %v47 = vld [vmem:[#allocation2 + $0x4] sm:$0xf]
    %v48 = vld [vmem:[#allocation5] sm:$0xff]
    %v49 = vld [vmem:[#allocation5 + $0x8] sm:$0xff]
    %v52 = vunpack.c.l.b16 %v44
    %v53 = vunpack.c.l.b16 %v45
    %v54 = vpack.c.b16 %v53, %v52
    %v57 = vunpack.c.l.b16 %v46
    %v58 = vunpack.c.l.b16 %v47
    %v59 = vpack.c.b16 %v58, %v57
    %vm61 = vcmask 130048
    %v63 = vsel %vm61, %v54, 0
    %65 = vmatprep.subr.bf16.mxu0 0
    %66 = vmatpush1.bf16.msra.mxu0 %v59
    %67 = vmatprep.subr.bf16.mxu0 0
    %68 = vmatpush1.bf16.msra.mxu0 0
    %69 = vmatprep.subr.bf16.mxu0 0
    %70 = vmatpush1.bf16.msra.mxu0 0
    %71 = vmatprep.subr.bf16.mxu0 0
    %72 = vmatpush1.bf16.msra.mxu0 0
    %73 = vmatprep.subr.bf16.mxu0 0
    %74 = vmatpush1.bf16.msra.mxu0 0
    %75 = vmatprep.subr.bf16.mxu0 0
    %76 = vmatpush1.bf16.msra.mxu0 0
    %77 = vmatprep.subr.bf16.mxu0 0
    %78 = vmatpush1.bf16.msra.mxu0 0
    %79 = vmatprep.subr.bf16.mxu0 0
    %80 = vmatpush1.bf16.msra.mxu0 0
    %81 = vmatprep.subr.bf16.mxu0 0
    %82 = vmatpush1.bf16.msra.mxu0 0
    %83 = vmatprep.subr.bf16.mxu0 0
    %84 = vmatpush1.bf16.msra.mxu0 0
    %85 = vmatprep.subr.bf16.mxu0 0
    %86 = vmatpush1.bf16.msra.mxu0 0
    %87 = vmatprep.subr.bf16.mxu0 0
    %88 = vmatpush1.bf16.msra.mxu0 0
    %89 = vmatprep.subr.bf16.mxu0 0
    %90 = vmatpush1.bf16.msra.mxu0 0
    %91 = vmatprep.subr.bf16.mxu0 0
    %92 = vmatpush1.bf16.msra.mxu0 0
    %93 = vmatprep.subr.bf16.mxu0 0
    %94 = vmatpush1.bf16.msra.mxu0 0
    %95 = vmatprep.subr.bf16.mxu0 0
    %96 = vmatpush1.bf16.msra.mxu0 0
    %97 = vmatprep.mubr.bf16.mxu0 0
    %98 = vmatmul.mubr.bf16.gmra.mrb[0].mxu0 %v63
    %v99 = vpop.f32.mrb[0].mxu0
    %v100 = vadd.f32 %v48, %v99
    %v101 = vpop.f32.mrb[0].mxu0
    %v102 = vpop.f32.mrb[0].mxu0
    %v103 = vadd.f32 %v49, %v102
    %v104 = vpop.f32.mrb[0].mxu0
    %105 = vdwg.mxu0
    %v106 = vld [vmem:[#allocation5 + $0x10] sm:$0xff]
    %v107 = vld [vmem:[#allocation5 + $0x18] sm:$0xff]
    %v108 = vld [vmem:[#allocation5 + $0x20] sm:$0xff]
    %v109 = vld [vmem:[#allocation5 + $0x28] sm:$0xff]
    %v110 = vld [vmem:[#allocation5 + $0x30] sm:$0xff]
    %v111 = vld [vmem:[#allocation5 + $0x38] sm:$0xff]
    %v112 = vld [vmem:[#allocation5 + $0x40] sm:$0xff]
    %v113 = vld [vmem:[#allocation5 + $0x48] sm:$0xff]
    %v114 = vpack.c.bf16 %v103, %v100
    %v115 = vld [vmem:[#allocation2 + $0x8] sm:$0xf]
    %v116 = vld [vmem:[#allocation2 + $0xc] sm:$0xf]
    %v117 = vld [vmem:[#allocation2 + $0x10] sm:$0xf]
    %v118 = vld [vmem:[#allocation2 + $0x14] sm:$0xf]
    %v119 = vld [vmem:[#allocation5 + $0x50] sm:$0x1]
    %v120 = vlaneseq
    %v121 = vshrl.u32 %v120, 7
    %v122 = vsub.s32 0, %v121
    %v123 = vrot.slane %v119, %v122
    %v128 = vunpack.c.l.b16 %v115
    %v129 = vunpack.c.l.b16 %v116
    %v130 = vunpack.c.l.b16 %v117
    %v131 = vunpack.c.l.b16 %v118
    %v132 = vpack.c.b16 %v129, %v128
    %v133 = vpack.c.b16 %v131, %v130
    %vm136 = vcmask 261120
    %v138 = vsel %vm136, %v114, 0
    %140 = vmatprep.subr.bf16.mxu0 0
    %141 = vmatpush1.bf16.msra.mxu0 %v132
    %142 = vmatprep.subr.bf16.mxu0 0
    %143 = vmatpush1.bf16.msra.mxu0 %v133
    %144 = vmatprep.subr.bf16.mxu0 0
    %145 = vmatpush1.bf16.msra.mxu0 0
    %146 = vmatprep.subr.bf16.mxu0 0
    %147 = vmatpush1.bf16.msra.mxu0 0
    %148 = vmatprep.subr.bf16.mxu0 0
    %149 = vmatpush1.bf16.msra.mxu0 0
    %150 = vmatprep.subr.bf16.mxu0 0
    %151 = vmatpush1.bf16.msra.mxu0 0
    %152 = vmatprep.subr.bf16.mxu0 0
    %153 = vmatpush1.bf16.msra.mxu0 0
    %154 = vmatprep.subr.bf16.mxu0 0
    %155 = vmatpush1.bf16.msra.mxu0 0
    %156 = vmatprep.subr.bf16.mxu0 0
    %157 = vmatpush1.bf16.msra.mxu0 0
    %158 = vmatprep.subr.bf16.mxu0 0
    %159 = vmatpush1.bf16.msra.mxu0 0
    %160 = vmatprep.subr.bf16.mxu0 0
    %161 = vmatpush1.bf16.msra.mxu0 0
    %162 = vmatprep.subr.bf16.mxu0 0
    %163 = vmatpush1.bf16.msra.mxu0 0
    %164 = vmatprep.subr.bf16.mxu0 0
    %165 = vmatpush1.bf16.msra.mxu0 0
    %166 = vmatprep.subr.bf16.mxu0 0
    %167 = vmatpush1.bf16.msra.mxu0 0
    %168 = vmatprep.subr.bf16.mxu0 0
    %169 = vmatpush1.bf16.msra.mxu0 0
    %170 = vmatprep.subr.bf16.mxu0 0
    %171 = vmatpush1.bf16.msra.mxu0 0
    %172 = vmatprep.mubr.bf16.mxu0 0
    %173 = vmatmul.mubr.bf16.gmra.mrb[0].mxu0 %v138
    %v174 = vpop.f32.mrb[0].mxu0
    %v175 = vadd.f32 %v123, %v174
    %v176 = vpop.f32.mrb[0].mxu0
    %v177 = vpop.f32.mrb[0].mxu0
    %v178 = vadd.f32 %v123, %v177
    %v179 = vpop.f32.mrb[0].mxu0
    %180 = vdwg.mxu0
    %183 = vrot.lane.b32.xlu0 %v175, 120
    %v184 = vpop.permute.xlu0 %183
    %185 = vrot.lane.b32.xlu0 %v178, 120
    %v186 = vpop.permute.xlu0 %185
    %189 = vrot.lane.b32.xlu0 %v175, 112
    %v190 = vpop.permute.xlu0 %189
    %191 = vrot.lane.b32.xlu0 %v178, 112
    %v192 = vpop.permute.xlu0 %191
    %195 = vrot.lane.b32.xlu0 %v175, 104
    %v196 = vpop.permute.xlu0 %195
    %197 = vrot.lane.b32.xlu0 %v178, 104
    %v198 = vpop.permute.xlu0 %197
    %v201 = vpack.c.bf16 %v178, %v175
    %v202 = vpack.c.bf16 %v186, %v184
    %v203 = vpack.c.bf16 %v192, %v190
    %v204 = vpack.c.bf16 %v198, %v196
    %209 = vrot.lane.b32.xlu0 %v201, 96
    %v210 = vpop.permute.xlu0 %209
    %211 = vrot.lane.b32.xlu0 %v202, 96
    %v212 = vpop.permute.xlu0 %211
    %213 = vrot.lane.b32.xlu0 %v203, 96
    %v214 = vpop.permute.xlu0 %213
    %215 = vrot.lane.b32.xlu0 %v204, 96
    %v216 = vpop.permute.xlu0 %215
    %vm217 = vcmask 64512
    %v219 = vsel %vm217, %v201, 0
    %v222 = vsel %vm217, %v202, 0
    %v225 = vsel %vm217, %v203, 0
    %v228 = vsel %vm217, %v204, 0
    %v231 = vsel %vm217, %v210, 0
    %v234 = vsel %vm217, %v212, 0
    %v237 = vsel %vm217, %v214, 0
    %v240 = vsel %vm217, %v216, 0
    %242 = vmatprep.subr.bf16.mxu0 0
    %243 = vmatpush1.bf16.xpose.msra.mxu0 %v231
    %244 = vmatprep.subr.bf16.mxu0 0
    %245 = vmatpush1.bf16.xpose.msra.mxu0 %v234
    %246 = vmatprep.subr.bf16.mxu0 0
    %247 = vmatpush1.bf16.xpose.msra.mxu0 %v237
    %248 = vmatprep.subr.bf16.mxu0 0
    %249 = vmatpush1.bf16.xpose.msra.mxu0 %v240
    %250 = vmatprep.subr.bf16.mxu0 0
    %251 = vmatpush1.bf16.xpose.msra.mxu0 0
    %252 = vmatprep.subr.bf16.mxu0 0
    %253 = vmatpush1.bf16.xpose.msra.mxu0 0
    %254 = vmatprep.subr.bf16.mxu0 0
    %255 = vmatpush1.bf16.xpose.msra.mxu0 0
    %256 = vmatprep.subr.bf16.mxu0 0
    %257 = vmatpush1.bf16.xpose.msra.mxu0 0
    %258 = vmatprep.subr.bf16.mxu0 0
    %259 = vmatpush1.bf16.xpose.msra.mxu0 0
    %260 = vmatprep.subr.bf16.mxu0 0
    %261 = vmatpush1.bf16.xpose.msra.mxu0 0
    %262 = vmatprep.subr.bf16.mxu0 0
    %263 = vmatpush1.bf16.xpose.msra.mxu0 0
    %264 = vmatprep.subr.bf16.mxu0 0
    %265 = vmatpush1.bf16.xpose.msra.mxu0 0
    %266 = vmatprep.subr.bf16.mxu0 0
    %267 = vmatpush1.bf16.xpose.msra.mxu0 0
    %268 = vmatprep.subr.bf16.mxu0 0
    %269 = vmatpush1.bf16.xpose.msra.mxu0 0
    %270 = vmatprep.subr.bf16.mxu0 0
    %271 = vmatpush1.bf16.xpose.msra.mxu0 0
    %272 = vmatprep.subr.bf16.mxu0 0
    %273 = vmatpush1.bf16.xpose.msra.mxu0 0
    %274 = vmatprep.mubr.bf16.mxu0 0
    %275 = vmatmul.mubr.bf16.gmra.mrb[0].mxu0 %v219
    %v276 = vpop.f32.mrb[0].mxu0
    %v277 = vadd.f32 %v106, %v276
    %v278 = vpop.f32.mrb[0].mxu0
    %v279 = vpop.f32.mrb[0].mxu0
    %v280 = vadd.f32 %v107, %v279
    %v281 = vpop.f32.mrb[0].mxu0
    %282 = vmatprep.mubr.bf16.mxu0 0
    %283 = vmatmul.mubr.bf16.gmra.mrb[0].mxu0 %v222
    %v284 = vpop.f32.mrb[0].mxu0
    %v285 = vadd.f32 %v108, %v284
    %v286 = vpop.f32.mrb[0].mxu0
    %v287 = vpop.f32.mrb[0].mxu0
    %v288 = vadd.f32 %v109, %v287
    %v289 = vpop.f32.mrb[0].mxu0
    %290 = vmatprep.mubr.bf16.mxu0 0
    %291 = vmatmul.mubr.bf16.gmra.mrb[0].mxu0 %v225
    %v292 = vpop.f32.mrb[0].mxu0
    %v293 = vadd.f32 %v110, %v292
    %v294 = vpop.f32.mrb[0].mxu0
    %v295 = vpop.f32.mrb[0].mxu0
    %v296 = vadd.f32 %v111, %v295
    %v297 = vpop.f32.mrb[0].mxu0
    %298 = vmatprep.mubr.bf16.mxu0 0
    %299 = vmatmul.mubr.bf16.gmra.mrb[0].mxu0 %v228
    %v300 = vpop.f32.mrb[0].mxu0
    %v301 = vadd.f32 %v112, %v300
    %v302 = vpop.f32.mrb[0].mxu0
    %v303 = vpop.f32.mrb[0].mxu0
    %v304 = vadd.f32 %v113, %v303
    %v305 = vpop.f32.mrb[0].mxu0
    %306 = vdwg.mxu0
    %vm307 = vcmask 523264
    %v308 = vsel %vm307, %v277, -inf
    %309 = vmax.xlane.f32.xlu0 %v308
    %v310 = vpop.xlane.xlu0 %309
    %v311 = vsel %vm307, %v280, -inf
    %312 = vmax.xlane.f32.xlu0 %v311
    %v313 = vpop.xlane.xlu0 %312
    %v314 = vsel %vm307, %v285, -inf
    %315 = vmax.xlane.f32.xlu0 %v314
    %v316 = vpop.xlane.xlu0 %315
    %v317 = vsel %vm307, %v288, -inf
    %318 = vmax.xlane.f32.xlu0 %v317
    %v319 = vpop.xlane.xlu0 %318
    %v320 = vsel %vm307, %v293, -inf
    %321 = vmax.xlane.f32.xlu0 %v320
    %v322 = vpop.xlane.xlu0 %321
    %v323 = vsel %vm307, %v296, -inf
    %324 = vmax.xlane.f32.xlu0 %v323
    %v325 = vpop.xlane.xlu0 %324
    %v326 = vsel %vm307, %v301, -inf
    %327 = vmax.xlane.f32.xlu0 %v326
    %v328 = vpop.xlane.xlu0 %327
    %v329 = vsel %vm307, %v304, -inf
    %330 = vmax.xlane.f32.xlu0 %v329
    %v331 = vpop.xlane.xlu0 %330
    %v332 = vsub.f32 %v277, %v310
    %v333 = vsub.f32 %v280, %v313
    %v334 = vsub.f32 %v285, %v316
    %v335 = vsub.f32 %v288, %v319
    %v336 = vsub.f32 %v293, %v322
    %v337 = vsub.f32 %v296, %v325
    %v338 = vsub.f32 %v301, %v328
    %v339 = vsub.f32 %v304, %v331
    %v340 = vmul.f32 %v332, 1.442695
    %v341 = vpow.pop %v340
    %v342 = vmul.f32 %v333, 1.442695
    %v343 = vpow.pop %v342
    %v344 = vmul.f32 %v334, 1.442695
    %v345 = vpow.pop %v344
    %v346 = vmul.f32 %v335, 1.442695
    %v347 = vpow.pop %v346
    %v348 = vmul.f32 %v336, 1.442695
    %v349 = vpow.pop %v348
    %v350 = vmul.f32 %v337, 1.442695
    %v351 = vpow.pop %v350
    %v352 = vmul.f32 %v338, 1.442695
    %v353 = vpow.pop %v352
    %v354 = vmul.f32 %v339, 1.442695
    %v355 = vpow.pop %v354
    %v356 = vsel %vm307, %v341, 0.0
    %357 = vadd.xlane.f32.xlu0 %v356
    %v358 = vpop.xlane.xlu0 %357
    %v359 = vsel %vm307, %v343, 0.0
    %360 = vadd.xlane.f32.xlu0 %v359
    %v361 = vpop.xlane.xlu0 %360
    %v362 = vsel %vm307, %v345, 0.0
    %363 = vadd.xlane.f32.xlu0 %v362
    %v364 = vpop.xlane.xlu0 %363
    %v365 = vsel %vm307, %v347, 0.0
    %366 = vadd.xlane.f32.xlu0 %v365
    %v367 = vpop.xlane.xlu0 %366
    %v368 = vsel %vm307, %v349, 0.0
    %369 = vadd.xlane.f32.xlu0 %v368
    %v370 = vpop.xlane.xlu0 %369
    %v371 = vsel %vm307, %v351, 0.0
    %372 = vadd.xlane.f32.xlu0 %v371
    %v373 = vpop.xlane.xlu0 %372
    %v374 = vsel %vm307, %v353, 0.0
    %375 = vadd.xlane.f32.xlu0 %v374
    %v376 = vpop.xlane.xlu0 %375
    %v377 = vsel %vm307, %v355, 0.0
    %378 = vadd.xlane.f32.xlu0 %v377
    %v379 = vpop.xlane.xlu0 %378
    %v380 = vrcp.pop %v358
    %v381 = vrcp.pop %v361
    %v382 = vrcp.pop %v364
    %v383 = vrcp.pop %v367
    %v384 = vrcp.pop %v370
    %v385 = vrcp.pop %v373
    %v386 = vrcp.pop %v376
    %v387 = vrcp.pop %v379
    %v388 = vmul.f32 %v341, %v380
    %v389 = vmul.f32 %v343, %v381
    %v390 = vmul.f32 %v345, %v382
    %v391 = vmul.f32 %v347, %v383
    %v392 = vmul.f32 %v349, %v384
    %v393 = vmul.f32 %v351, %v385
    %v394 = vmul.f32 %v353, %v386
    %v395 = vmul.f32 %v355, %v387
    %v396 = vpack.c.bf16 %v389, %v388
    %v397 = vpack.c.bf16 %v391, %v390
    %v398 = vpack.c.bf16 %v393, %v392
    %v399 = vpack.c.bf16 %v395, %v394
    %400 = vrot.lane.b32.xlu0 %v201, 64
    %v401 = vpop.permute.xlu0 %400
    %402 = vrot.lane.b32.xlu0 %v202, 64
    %v403 = vpop.permute.xlu0 %402
    %404 = vrot.lane.b32.xlu0 %v203, 64
    %v405 = vpop.permute.xlu0 %404
    %406 = vrot.lane.b32.xlu0 %v204, 64
    %v407 = vpop.permute.xlu0 %406
    %v413 = vsel %vm307, %v396, 0
    %v416 = vsel %vm307, %v397, 0
    %v419 = vsel %vm307, %v398, 0
    %v422 = vsel %vm307, %v399, 0
    %424 = vmatprep.subr.bf16.mxu0 0
    %425 = vmatpush1.bf16.msra.mxu0 %v401
    %426 = vmatprep.subr.bf16.mxu0 0
    %427 = vmatpush1.bf16.msra.mxu0 %v403
    %428 = vmatprep.subr.bf16.mxu0 0
    %429 = vmatpush1.bf16.msra.mxu0 %v405
    %430 = vmatprep.subr.bf16.mxu0 0
    %431 = vmatpush1.bf16.msra.mxu0 %v407
    %432 = vmatprep.subr.bf16.mxu0 0
    %433 = vmatpush1.bf16.msra.mxu0 0
    %434 = vmatprep.subr.bf16.mxu0 0
    %435 = vmatpush1.bf16.msra.mxu0 0
    %436 = vmatprep.subr.bf16.mxu0 0
    %437 = vmatpush1.bf16.msra.mxu0 0
    %438 = vmatprep.subr.bf16.mxu0 0
    %439 = vmatpush1.bf16.msra.mxu0 0
    %440 = vmatprep.subr.bf16.mxu0 0
    %441 = vmatpush1.bf16.msra.mxu0 0
    %442 = vmatprep.subr.bf16.mxu0 0
    %443 = vmatpush1.bf16.msra.mxu0 0
    %444 = vmatprep.subr.bf16.mxu0 0
    %445 = vmatpush1.bf16.msra.mxu0 0
    %446 = vmatprep.subr.bf16.mxu0 0
    %447 = vmatpush1.bf16.msra.mxu0 0
    %448 = vmatprep.subr.bf16.mxu0 0
    %449 = vmatpush1.bf16.msra.mxu0 0
    %450 = vmatprep.subr.bf16.mxu0 0
    %451 = vmatpush1.bf16.msra.mxu0 0
    %452 = vmatprep.subr.bf16.mxu0 0
    %453 = vmatpush1.bf16.msra.mxu0 0
    %454 = vmatprep.subr.bf16.mxu0 0
    %455 = vmatpush1.bf16.msra.mxu0 0
    %456 = vmatprep.mubr.bf16.mxu0 0
    %457 = vmatmul.mubr.bf16.gmra.mrb[0].mxu0 %v413
    %v458 = vpop.f32.mrb[0].mxu0
    %v459 = vadd.f32 0.0, %v458
    %v460 = vpop.f32.mrb[0].mxu0
    %v461 = vpop.f32.mrb[0].mxu0
    %v462 = vadd.f32 0.0, %v461
    %v463 = vpop.f32.mrb[0].mxu0
    %464 = vmatprep.mubr.bf16.mxu0 0
    %465 = vmatmul.mubr.bf16.gmra.mrb[0].mxu0 %v416
    %v466 = vpop.f32.mrb[0].mxu0
    %v467 = vadd.f32 0.0, %v466
    %v468 = vpop.f32.mrb[0].mxu0
    %v469 = vpop.f32.mrb[0].mxu0
    %v470 = vadd.f32 0.0, %v469
    %v471 = vpop.f32.mrb[0].mxu0
    %472 = vmatprep.mubr.bf16.mxu0 0
    %473 = vmatmul.mubr.bf16.gmra.mrb[0].mxu0 %v419
    %v474 = vpop.f32.mrb[0].mxu0
    %v475 = vadd.f32 0.0, %v474
    %v476 = vpop.f32.mrb[0].mxu0
    %v477 = vpop.f32.mrb[0].mxu0
    %v478 = vadd.f32 0.0, %v477
    %v479 = vpop.f32.mrb[0].mxu0
    %480 = vmatprep.mubr.bf16.mxu0 0
    %481 = vmatmul.mubr.bf16.gmra.mrb[0].mxu0 %v422
    %v482 = vpop.f32.mrb[0].mxu0
    %v483 = vadd.f32 0.0, %v482
    %v484 = vpop.f32.mrb[0].mxu0
    %v485 = vpop.f32.mrb[0].mxu0
    %v486 = vadd.f32 0.0, %v485
    %v487 = vpop.f32.mrb[0].mxu0
    %488 = vdwg.mxu0
    %v489 = vld [vmem:[#allocation2 + $0x18] sm:$0xf]
    %v490 = vld [vmem:[#allocation2 + $0x1c] sm:$0xf]
    %v491 = vld [vmem:[#allocation2 + $0x20] sm:$0xf]
    %v492 = vld [vmem:[#allocation2 + $0x24] sm:$0xf]
    %v493 = vpack.c.bf16 %v462, %v459
    %v494 = vpack.c.bf16 %v470, %v467
    %v496 = vsel %vm217, %v494, 0
    %vm498 = vcmask 1043456
    %v500 = vsel %vm498, %v490, 0
    %502 = vmatprep.subr.bf16.mxu0 0
    %503 = vmatpush1.bf16.msra.mxu0 %v500
    %504 = vmatprep.subr.bf16.mxu0 0
    %505 = vmatpush1.bf16.msra.mxu0 0
    %506 = vmatprep.subr.bf16.mxu0 0
    %507 = vmatpush1.bf16.msra.mxu0 0
    %508 = vmatprep.subr.bf16.mxu0 0
    %509 = vmatpush1.bf16.msra.mxu0 0
    %510 = vmatprep.subr.bf16.mxu0 0
    %511 = vmatpush1.bf16.msra.mxu0 0
    %512 = vmatprep.subr.bf16.mxu0 0
    %513 = vmatpush1.bf16.msra.mxu0 0
    %514 = vmatprep.subr.bf16.mxu0 0
    %515 = vmatpush1.bf16.msra.mxu0 0
    %516 = vmatprep.subr.bf16.mxu0 0
    %517 = vmatpush1.bf16.msra.mxu0 0
    %518 = vmatprep.subr.bf16.mxu0 0
    %519 = vmatpush1.bf16.msra.mxu0 0
    %520 = vmatprep.subr.bf16.mxu0 0
    %521 = vmatpush1.bf16.msra.mxu0 0
    %522 = vmatprep.subr.bf16.mxu0 0
    %523 = vmatpush1.bf16.msra.mxu0 0
    %524 = vmatprep.subr.bf16.mxu0 0
    %525 = vmatpush1.bf16.msra.mxu0 0
    %526 = vmatprep.subr.bf16.mxu0 0
    %527 = vmatpush1.bf16.msra.mxu0 0
    %528 = vmatprep.subr.bf16.mxu0 0
    %529 = vmatpush1.bf16.msra.mxu0 0
    %530 = vmatprep.subr.bf16.mxu0 0
    %531 = vmatpush1.bf16.msra.mxu0 0
    %532 = vmatprep.subr.bf16.mxu0 0
    %533 = vmatpush1.bf16.msra.mxu0 0
    %534 = vmatprep.mubr.bf16.mxu0 0
    %535 = vmatmul.mubr.bf16.gmra.mrb[0].mxu0 %v496
    %v536 = vpop.f32.mrb[0].mxu0
    %v537 = vadd.f32 0.0, %v536
    %v538 = vpop.f32.mrb[0].mxu0
    %v539 = vpop.f32.mrb[0].mxu0
    %v540 = vadd.f32 0.0, %v539
    %v541 = vpop.f32.mrb[0].mxu0
    %542 = vdwg.mxu0
    %v544 = vsel %vm217, %v493, 0
    %v547 = vsel %vm498, %v489, 0
    %549 = vmatprep.subr.bf16.mxu0 0
    %550 = vmatpush1.bf16.msra.mxu0 %v547
    %551 = vmatprep.subr.bf16.mxu0 0
    %552 = vmatpush1.bf16.msra.mxu0 0
    %553 = vmatprep.subr.bf16.mxu0 0
    %554 = vmatpush1.bf16.msra.mxu0 0
    %555 = vmatprep.subr.bf16.mxu0 0
    %556 = vmatpush1.bf16.msra.mxu0 0
    %557 = vmatprep.subr.bf16.mxu0 0
    %558 = vmatpush1.bf16.msra.mxu0 0
    %559 = vmatprep.subr.bf16.mxu0 0
    %560 = vmatpush1.bf16.msra.mxu0 0
    %561 = vmatprep.subr.bf16.mxu0 0
    %562 = vmatpush1.bf16.msra.mxu0 0
    %563 = vmatprep.subr.bf16.mxu0 0
    %564 = vmatpush1.bf16.msra.mxu0 0
    %565 = vmatprep.subr.bf16.mxu0 0
    %566 = vmatpush1.bf16.msra.mxu0 0
    %567 = vmatprep.subr.bf16.mxu0 0
    %568 = vmatpush1.bf16.msra.mxu0 0
    %569 = vmatprep.subr.bf16.mxu0 0
    %570 = vmatpush1.bf16.msra.mxu0 0
    %571 = vmatprep.subr.bf16.mxu0 0
    %572 = vmatpush1.bf16.msra.mxu0 0
    %573 = vmatprep.subr.bf16.mxu0 0
    %574 = vmatpush1.bf16.msra.mxu0 0
    %575 = vmatprep.subr.bf16.mxu0 0
    %576 = vmatpush1.bf16.msra.mxu0 0
    %577 = vmatprep.subr.bf16.mxu0 0
    %578 = vmatpush1.bf16.msra.mxu0 0
    %579 = vmatprep.subr.bf16.mxu0 0
    %580 = vmatpush1.bf16.msra.mxu0 0
    %581 = vmatprep.mubr.bf16.mxu0 0
    %582 = vmatmul.mubr.bf16.gmra.mrb[0].mxu0 %v544
    %v583 = vpop.f32.mrb[0].mxu0
    %v584 = vadd.f32 %v537, %v583
    %v585 = vpop.f32.mrb[0].mxu0
    %v586 = vpop.f32.mrb[0].mxu0
    %v587 = vadd.f32 %v540, %v586
    %v588 = vpop.f32.mrb[0].mxu0
    %589 = vdwg.mxu0
    %v590 = vpack.c.bf16 %v478, %v475
    %v592 = vsel %vm217, %v590, 0
    %v595 = vsel %vm498, %v491, 0
    %597 = vmatprep.subr.bf16.mxu0 0
    %598 = vmatpush1.bf16.msra.mxu0 %v595
    %599 = vmatprep.subr.bf16.mxu0 0
    %600 = vmatpush1.bf16.msra.mxu0 0
    %601 = vmatprep.subr.bf16.mxu0 0
    %602 = vmatpush1.bf16.msra.mxu0 0
    %603 = vmatprep.subr.bf16.mxu0 0
    %604 = vmatpush1.bf16.msra.mxu0 0
    %605 = vmatprep.subr.bf16.mxu0 0
    %606 = vmatpush1.bf16.msra.mxu0 0
    %607 = vmatprep.subr.bf16.mxu0 0
    %608 = vmatpush1.bf16.msra.mxu0 0
    %609 = vmatprep.subr.bf16.mxu0 0
    %610 = vmatpush1.bf16.msra.mxu0 0
    %611 = vmatprep.subr.bf16.mxu0 0
    %612 = vmatpush1.bf16.msra.mxu0 0
    %613 = vmatprep.subr.bf16.mxu0 0
    %614 = vmatpush1.bf16.msra.mxu0 0
    %615 = vmatprep.subr.bf16.mxu0 0
    %616 = vmatpush1.bf16.msra.mxu0 0
    %617 = vmatprep.subr.bf16.mxu0 0
    %618 = vmatpush1.bf16.msra.mxu0 0
    %619 = vmatprep.subr.bf16.mxu0 0
    %620 = vmatpush1.bf16.msra.mxu0 0
    %621 = vmatprep.subr.bf16.mxu0 0
    %622 = vmatpush1.bf16.msra.mxu0 0
    %623 = vmatprep.subr.bf16.mxu0 0
    %624 = vmatpush1.bf16.msra.mxu0 0
    %625 = vmatprep.subr.bf16.mxu0 0
    %626 = vmatpush1.bf16.msra.mxu0 0
    %627 = vmatprep.subr.bf16.mxu0 0
    %628 = vmatpush1.bf16.msra.mxu0 0
    %629 = vmatprep.mubr.bf16.mxu0 0
    %630 = vmatmul.mubr.bf16.gmra.mrb[0].mxu0 %v592
    %v631 = vpop.f32.mrb[0].mxu0
    %v632 = vadd.f32 0.0, %v631
    %v633 = vpop.f32.mrb[0].mxu0
    %v634 = vpop.f32.mrb[0].mxu0
    %v635 = vadd.f32 0.0, %v634
    %v636 = vpop.f32.mrb[0].mxu0
    %637 = vdwg.mxu0
    %v638 = vadd.f32 %v584, %v632
    %v639 = vadd.f32 %v587, %v635
    %v640 = vpack.c.bf16 %v486, %v483
    %v642 = vsel %vm217, %v640, 0
    %v645 = vsel %vm498, %v492, 0
    %647 = vmatprep.subr.bf16.mxu0 0
    %648 = vmatpush1.bf16.msra.mxu0 %v645
    %649 = vmatprep.subr.bf16.mxu0 0
    %650 = vmatpush1.bf16.msra.mxu0 0
    %651 = vmatprep.subr.bf16.mxu0 0
    %652 = vmatpush1.bf16.msra.mxu0 0
    %653 = vmatprep.subr.bf16.mxu0 0
    %654 = vmatpush1.bf16.msra.mxu0 0
    %655 = vmatprep.subr.bf16.mxu0 0
    %656 = vmatpush1.bf16.msra.mxu0 0
    %657 = vmatprep.subr.bf16.mxu0 0
    %658 = vmatpush1.bf16.msra.mxu0 0
    %659 = vmatprep.subr.bf16.mxu0 0
    %660 = vmatpush1.bf16.msra.mxu0 0
    %661 = vmatprep.subr.bf16.mxu0 0
    %662 = vmatpush1.bf16.msra.mxu0 0
    %663 = vmatprep.subr.bf16.mxu0 0
    %664 = vmatpush1.bf16.msra.mxu0 0
    %665 = vmatprep.subr.bf16.mxu0 0
    %666 = vmatpush1.bf16.msra.mxu0 0
    %667 = vmatprep.subr.bf16.mxu0 0
    %668 = vmatpush1.bf16.msra.mxu0 0
    %669 = vmatprep.subr.bf16.mxu0 0
    %670 = vmatpush1.bf16.msra.mxu0 0
    %671 = vmatprep.subr.bf16.mxu0 0
    %672 = vmatpush1.bf16.msra.mxu0 0
    %673 = vmatprep.subr.bf16.mxu0 0
    %674 = vmatpush1.bf16.msra.mxu0 0
    %675 = vmatprep.subr.bf16.mxu0 0
    %676 = vmatpush1.bf16.msra.mxu0 0
    %677 = vmatprep.subr.bf16.mxu0 0
    %678 = vmatpush1.bf16.msra.mxu0 0
    %679 = vmatprep.mubr.bf16.mxu0 0
    %680 = vmatmul.mubr.bf16.gmra.mrb[0].mxu0 %v642
    %v681 = vpop.f32.mrb[0].mxu0
    %v682 = vadd.f32 0.0, %v681
    %v683 = vpop.f32.mrb[0].mxu0
    %v684 = vpop.f32.mrb[0].mxu0
    %v685 = vadd.f32 0.0, %v684
    %v686 = vpop.f32.mrb[0].mxu0
    %687 = vdwg.mxu0
    %v688 = vadd.f32 %v638, %v682
    %v689 = vadd.f32 %v639, %v685
    %v690 = vld [vmem:[#allocation5 + $0x58] sm:$0x1]
    %v691 = vlaneseq
    %v692 = vshrl.u32 %v691, 7
    %v693 = vsub.s32 0, %v692
    %v694 = vrot.slane %v690, %v693
    %v695 = vadd.f32 %v688, %v694
    %v696 = vadd.f32 %v689, %v694
    %v697 = vadd.f32 %v100, %v695
    %v698 = vadd.f32 %v103, %v696
    %v699 = vld [vmem:[#allocation5 + $0x60] sm:$0x1]
    %v700 = vld [vmem:[#allocation5 + $0x68] sm:$0x1]
    %v701 = vsel %vm136, %v697, 0.0
    %702 = vadd.xlane.f32.xlu0 %v701
    %v703 = vpop.xlane.xlu0 %702
    %v704 = vsel %vm136, %v698, 0.0
    %705 = vadd.xlane.f32.xlu0 %v704
    %v706 = vpop.xlane.xlu0 %705
    %v707 = vmul.f32 %v703, 0.03125
    %v708 = vmul.f32 %v706, 0.03125
    %v709 = vmul.f32 %v697, %v697
    %v710 = vmul.f32 %v698, %v698
    %v711 = vsel %vm136, %v709, 0.0
    %712 = vadd.xlane.f32.xlu0 %v711
    %v713 = vpop.xlane.xlu0 %712
    %v714 = vsel %vm136, %v710, 0.0
    %715 = vadd.xlane.f32.xlu0 %v714
    %v716 = vpop.xlane.xlu0 %715
    %v717 = vmul.f32 %v713, 0.03125
    %v718 = vmul.f32 %v716, 0.03125
    %v719 = vmul.f32 %v707, %v707
    %v720 = vmul.f32 %v708, %v708
    %v721 = vsub.f32 %v717, %v719
    %v722 = vsub.f32 %v718, %v720
    %v723 = vsub.f32 %v697, %v707
    %v724 = vsub.f32 %v698, %v708
    %v725 = vadd.f32 %v721, 1e-05
    %v726 = vadd.f32 %v722, 1e-05
    %v727 = vrsqrt.pop %v725
    %v728 = vrsqrt.pop %v726
    %v729 = vmul.f32 %v723, %v727
    %v730 = vmul.f32 %v724, %v728
    %v731 = vlaneseq
    %v732 = vshrl.u32 %v731, 7
    %v733 = vsub.s32 0, %v732
    %v734 = vrot.slane %v699, %v733
    %v735 = vmul.f32 %v729, %v734
    %v736 = vmul.f32 %v730, %v734
    %v737 = vlaneseq
    %v738 = vshrl.u32 %v737, 7
    %v739 = vsub.s32 0, %v738
    %v740 = vrot.slane %v700, %v739
    %v741 = vadd.f32 %v735, %v740
    %v742 = vadd.f32 %v736, %v740
    %v743 = vpack.c.bf16 %v742, %v741
    %v744 = vld [vmem:[#allocation2 + $0x28] sm:$0xf]
    %v745 = vld [vmem:[#allocation2 + $0x2c] sm:$0xf]
    %v746 = vld [vmem:[#allocation2 + $0x30] sm:$0xf]
    %v747 = vld [vmem:[#allocation2 + $0x34] sm:$0xf]
    %v748 = vld [vmem:[#allocation5 + $0x70] sm:$0x1]
    %v749 = vlaneseq
    %v750 = vshrl.u32 %v749, 7
    %v751 = vsub.s32 0, %v750
    %v752 = vrot.slane %v748, %v751
    %v757 = vunpack.c.l.b16 %v744
    %v758 = vunpack.c.l.b16 %v745
    %v759 = vunpack.c.l.b16 %v746
    %v760 = vunpack.c.l.b16 %v747
    %v761 = vpack.c.b16 %v758, %v757
    %v762 = vpack.c.b16 %v760, %v759
    %v766 = vsel %vm136, %v743, 0
    %768 = vmatprep.subr.bf16.mxu0 0
    %769 = vmatpush1.bf16.msra.mxu0 %v761
    %770 = vmatprep.subr.bf16.mxu0 0
    %771 = vmatpush1.bf16.msra.mxu0 %v762
    %772 = vmatprep.subr.bf16.mxu0 0
    %773 = vmatpush1.bf16.msra.mxu0 0
    %774 = vmatprep.subr.bf16.mxu0 0
    %775 = vmatpush1.bf16.msra.mxu0 0
    %776 = vmatprep.subr.bf16.mxu0 0
    %777 = vmatpush1.bf16.msra.mxu0 0
    %778 = vmatprep.subr.bf16.mxu0 0
    %779 = vmatpush1.bf16.msra.mxu0 0
    %780 = vmatprep.subr.bf16.mxu0 0
    %781 = vmatpush1.bf16.msra.mxu0 0
    %782 = vmatprep.subr.bf16.mxu0 0
    %783 = vmatpush1.bf16.msra.mxu0 0
    %784 = vmatprep.subr.bf16.mxu0 0
    %785 = vmatpush1.bf16.msra.mxu0 0
    %786 = vmatprep.subr.bf16.mxu0 0
    %787 = vmatpush1.bf16.msra.mxu0 0
    %788 = vmatprep.subr.bf16.mxu0 0
    %789 = vmatpush1.bf16.msra.mxu0 0
    %790 = vmatprep.subr.bf16.mxu0 0
    %791 = vmatpush1.bf16.msra.mxu0 0
    %792 = vmatprep.subr.bf16.mxu0 0
    %793 = vmatpush1.bf16.msra.mxu0 0
    %794 = vmatprep.subr.bf16.mxu0 0
    %795 = vmatpush1.bf16.msra.mxu0 0
    %796 = vmatprep.subr.bf16.mxu0 0
    %797 = vmatpush1.bf16.msra.mxu0 0
    %798 = vmatprep.subr.bf16.mxu0 0
    %799 = vmatpush1.bf16.msra.mxu0 0
    %800 = vmatprep.mubr.bf16.mxu0 0
    %801 = vmatmul.mubr.bf16.gmra.mrb[0].mxu0 %v766
    %v802 = vpop.f32.mrb[0].mxu0
    %v803 = vadd.f32 %v752, %v802
    %v804 = vpop.f32.mrb[0].mxu0
    %v805 = vpop.f32.mrb[0].mxu0
    %v806 = vadd.f32 %v752, %v805
    %v807 = vpop.f32.mrb[0].mxu0
    %808 = vdwg.mxu0
    %v809 = vmax.f32 %v803, 0.0
    %v810 = vmax.f32 %v806, 0.0
    %v811 = vpack.c.bf16 %v810, %v809
    %v812 = vld [vmem:[#allocation2 + $0x38] sm:$0xf]
    %v813 = vld [vmem:[#allocation2 + $0x3c] sm:$0xf]
    %v814 = vld [vmem:[#allocation2 + $0x40] sm:$0xf]
    %v815 = vld [vmem:[#allocation2 + $0x44] sm:$0xf]
    %v816 = vld [vmem:[#allocation2 + $0x48] sm:$0xf]
    %v817 = vld [vmem:[#allocation2 + $0x4c] sm:$0xf]
    %v818 = vld [vmem:[#allocation2 + $0x50] sm:$0xf]
    %v819 = vld [vmem:[#allocation2 + $0x54] sm:$0xf]
    %v820 = vld [vmem:[#allocation5 + $0x78] sm:$0x1]
    %v821 = vlaneseq
    %v822 = vshrl.u32 %v821, 7
    %v823 = vsub.s32 0, %v822
    %v824 = vrot.slane %v820, %v823
    %v833 = vunpack.c.l.b16 %v812
    %v834 = vunpack.c.l.b16 %v813
    %v835 = vunpack.c.l.b16 %v814
    %v836 = vunpack.c.l.b16 %v815
    %v837 = vunpack.c.l.b16 %v816
    %v838 = vunpack.c.l.b16 %v817
    %v839 = vunpack.c.l.b16 %v818
    %v840 = vunpack.c.l.b16 %v819
    %v841 = vpack.c.b16 %v834, %v833
    %v842 = vpack.c.b16 %v836, %v835
    %v843 = vpack.c.b16 %v838, %v837
    %v844 = vpack.c.b16 %v840, %v839
    %v850 = vsel %vm307, %v811, 0
    %852 = vmatprep.subr.bf16.mxu0 0
    %853 = vmatpush1.bf16.msra.mxu0 %v841
    %854 = vmatprep.subr.bf16.mxu0 0
    %855 = vmatpush1.bf16.msra.mxu0 %v842
    %856 = vmatprep.subr.bf16.mxu0 0
    %857 = vmatpush1.bf16.msra.mxu0 %v843
    %858 = vmatprep.subr.bf16.mxu0 0
    %859 = vmatpush1.bf16.msra.mxu0 %v844
    %860 = vmatprep.subr.bf16.mxu0 0
    %861 = vmatpush1.bf16.msra.mxu0 0
    %862 = vmatprep.subr.bf16.mxu0 0
    %863 = vmatpush1.bf16.msra.mxu0 0
    %864 = vmatprep.subr.bf16.mxu0 0
    %865 = vmatpush1.bf16.msra.mxu0 0
    %866 = vmatprep.subr.bf16.mxu0 0
    %867 = vmatpush1.bf16.msra.mxu0 0
    %868 = vmatprep.subr.bf16.mxu0 0
    %869 = vmatpush1.bf16.msra.mxu0 0
    %870 = vmatprep.subr.bf16.mxu0 0
    %871 = vmatpush1.bf16.msra.mxu0 0
    %872 = vmatprep.subr.bf16.mxu0 0
    %873 = vmatpush1.bf16.msra.mxu0 0
    %874 = vmatprep.subr.bf16.mxu0 0
    %875 = vmatpush1.bf16.msra.mxu0 0
    %876 = vmatprep.subr.bf16.mxu0 0
    %877 = vmatpush1.bf16.msra.mxu0 0
    %878 = vmatprep.subr.bf16.mxu0 0
    %879 = vmatpush1.bf16.msra.mxu0 0
    %880 = vmatprep.subr.bf16.mxu0 0
    %881 = vmatpush1.bf16.msra.mxu0 0
    %882 = vmatprep.subr.bf16.mxu0 0
    %883 = vmatpush1.bf16.msra.mxu0 0
    %884 = vmatprep.mubr.bf16.mxu0 0
    %885 = vmatmul.mubr.bf16.gmra.mrb[0].mxu0 %v850
    %v886 = vpop.f32.mrb[0].mxu0
    %v887 = vadd.f32 %v824, %v886
    %v888 = vpop.f32.mrb[0].mxu0
    %v889 = vpop.f32.mrb[0].mxu0
    %v890 = vadd.f32 %v824, %v889
    %v891 = vpop.f32.mrb[0].mxu0
    %892 = vdwg.mxu0
    %v893 = vadd.f32 %v741, %v887
    %v894 = vadd.f32 %v742, %v890
    %v895 = vld [vmem:[#allocation5 + $0x80] sm:$0x1]
    %v896 = vld [vmem:[#allocation5 + $0x88] sm:$0x1]
    %v897 = vsel %vm136, %v893, 0.0
    %898 = vadd.xlane.f32.xlu0 %v897
    %v899 = vpop.xlane.xlu0 %898
    %v900 = vsel %vm136, %v894, 0.0
    %901 = vadd.xlane.f32.xlu0 %v900
    %v902 = vpop.xlane.xlu0 %901
    %v903 = vmul.f32 %v899, 0.03125
    %v904 = vmul.f32 %v902, 0.03125
    %v905 = vmul.f32 %v893, %v893
    %v906 = vmul.f32 %v894, %v894
    %v907 = vsel %vm136, %v905, 0.0
    %908 = vadd.xlane.f32.xlu0 %v907
    %v909 = vpop.xlane.xlu0 %908
    %v910 = vsel %vm136, %v906, 0.0
    %911 = vadd.xlane.f32.xlu0 %v910
    %v912 = vpop.xlane.xlu0 %911
    %v913 = vmul.f32 %v909, 0.03125
    %v914 = vmul.f32 %v912, 0.03125
    %v915 = vmul.f32 %v903, %v903
    %v916 = vmul.f32 %v904, %v904
    %v917 = vsub.f32 %v913, %v915
    %v918 = vsub.f32 %v914, %v916
    %v919 = vsub.f32 %v893, %v903
    %v920 = vsub.f32 %v894, %v904
    %v921 = vadd.f32 %v917, 1e-05
    %v922 = vadd.f32 %v918, 1e-05
    %v923 = vrsqrt.pop %v921
    %v924 = vrsqrt.pop %v922
    %v925 = vmul.f32 %v919, %v923
    %v926 = vmul.f32 %v920, %v924
    %v927 = vlaneseq
    %v928 = vshrl.u32 %v927, 7
    %v929 = vsub.s32 0, %v928
    %v930 = vrot.slane %v895, %v929
    %v931 = vmul.f32 %v925, %v930
    %v932 = vmul.f32 %v926, %v930
    %v933 = vlaneseq
    %v934 = vshrl.u32 %v933, 7
    %v935 = vsub.s32 0, %v934
    %v936 = vrot.slane %v896, %v935
    %v937 = vadd.f32 %v931, %v936
    %v938 = vadd.f32 %v932, %v936
    %v939 = vpack.c.bf16 %v938, %v937
    %v940 = vld [vmem:[#allocation2 + $0x58] sm:$0xf]
    %v941 = vld [vmem:[#allocation2 + $0x5c] sm:$0xf]
    %v942 = vld [vmem:[#allocation2 + $0x60] sm:$0xf]
    %v943 = vld [vmem:[#allocation2 + $0x64] sm:$0xf]
    %v944 = vld [vmem:[#allocation5 + $0x90] sm:$0x1]
    %v945 = vlaneseq
    %v946 = vshrl.u32 %v945, 7
    %v947 = vsub.s32 0, %v946
    %v948 = vrot.slane %v944, %v947
    %v953 = vunpack.c.l.b16 %v940
    %v954 = vunpack.c.l.b16 %v941
    %v955 = vunpack.c.l.b16 %v942
    %v956 = vunpack.c.l.b16 %v943
    %v957 = vpack.c.b16 %v954, %v953
    %v958 = vpack.c.b16 %v956, %v955
    %v962 = vsel %vm136, %v939, 0
    %964 = vmatprep.subr.bf16.mxu0 0
    %965 = vmatpush1.bf16.msra.mxu0 %v957
    %966 = vmatprep.subr.bf16.mxu0 0
    %967 = vmatpush1.bf16.msra.mxu0 %v958
    %968 = vmatprep.subr.bf16.mxu0 0
    %969 = vmatpush1.bf16.msra.mxu0 0
    %970 = vmatprep.subr.bf16.mxu0 0
    %971 = vmatpush1.bf16.msra.mxu0 0
    %972 = vmatprep.subr.bf16.mxu0 0
    %973 = vmatpush1.bf16.msra.mxu0 0
    %974 = vmatprep.subr.bf16.mxu0 0
    %975 = vmatpush1.bf16.msra.mxu0 0
    %976 = vmatprep.subr.bf16.mxu0 0
    %977 = vmatpush1.bf16.msra.mxu0 0
    %978 = vmatprep.subr.bf16.mxu0 0
    %979 = vmatpush1.bf16.msra.mxu0 0
    %980 = vmatprep.subr.bf16.mxu0 0
    %981 = vmatpush1.bf16.msra.mxu0 0
    %982 = vmatprep.subr.bf16.mxu0 0
    %983 = vmatpush1.bf16.msra.mxu0 0
    %984 = vmatprep.subr.bf16.mxu0 0
    %985 = vmatpush1.bf16.msra.mxu0 0
    %986 = vmatprep.subr.bf16.mxu0 0
    %987 = vmatpush1.bf16.msra.mxu0 0
    %988 = vmatprep.subr.bf16.mxu0 0
    %989 = vmatpush1.bf16.msra.mxu0 0
    %990 = vmatprep.subr.bf16.mxu0 0
    %991 = vmatpush1.bf16.msra.mxu0 0
    %992 = vmatprep.subr.bf16.mxu0 0
    %993 = vmatpush1.bf16.msra.mxu0 0
    %994 = vmatprep.subr.bf16.mxu0 0
    %995 = vmatpush1.bf16.msra.mxu0 0
    %996 = vmatprep.mubr.bf16.mxu0 0
    %997 = vmatmul.mubr.bf16.gmra.mrb[0].mxu0 %v962
    %v998 = vpop.f32.mrb[0].mxu0
    %v999 = vadd.f32 %v948, %v998
    %v1000 = vpop.f32.mrb[0].mxu0
    %v1001 = vpop.f32.mrb[0].mxu0
    %v1002 = vadd.f32 %v948, %v1001
    %v1003 = vpop.f32.mrb[0].mxu0
    %1004 = vdwg.mxu0
    %1007 = vrot.lane.b32.xlu0 %v999, 120
    %v1008 = vpop.permute.xlu0 %1007
    %1009 = vrot.lane.b32.xlu0 %v1002, 120
    %v1010 = vpop.permute.xlu0 %1009
    %1013 = vrot.lane.b32.xlu0 %v999, 112
    %v1014 = vpop.permute.xlu0 %1013
    %1015 = vrot.lane.b32.xlu0 %v1002, 112
    %v1016 = vpop.permute.xlu0 %1015
    %1019 = vrot.lane.b32.xlu0 %v999, 104
    %v1020 = vpop.permute.xlu0 %1019
    %1021 = vrot.lane.b32.xlu0 %v1002, 104
    %v1022 = vpop.permute.xlu0 %1021
    %v1025 = vpack.c.bf16 %v1002, %v999
    %v1026 = vpack.c.bf16 %v1010, %v1008
    %v1027 = vpack.c.bf16 %v1016, %v1014
    %v1028 = vpack.c.bf16 %v1022, %v1020
    %1033 = vrot.lane.b32.xlu0 %v1025, 96
    %v1034 = vpop.permute.xlu0 %1033
    %1035 = vrot.lane.b32.xlu0 %v1026, 96
    %v1036 = vpop.permute.xlu0 %1035
    %1037 = vrot.lane.b32.xlu0 %v1027, 96
    %v1038 = vpop.permute.xlu0 %1037
    %1039 = vrot.lane.b32.xlu0 %v1028, 96
    %v1040 = vpop.permute.xlu0 %1039
    %v1042 = vsel %vm217, %v1025, 0
    %v1045 = vsel %vm217, %v1026, 0
    %v1048 = vsel %vm217, %v1027, 0
    %v1051 = vsel %vm217, %v1028, 0
    %v1054 = vsel %vm217, %v1034, 0
    %v1057 = vsel %vm217, %v1036, 0
    %v1060 = vsel %vm217, %v1038, 0
    %v1063 = vsel %vm217, %v1040, 0
    %1065 = vmatprep.subr.bf16.mxu0 0
    %1066 = vmatpush1.bf16.xpose.msra.mxu0 %v1054
    %1067 = vmatprep.subr.bf16.mxu0 0
    %1068 = vmatpush1.bf16.xpose.msra.mxu0 %v1057
    %1069 = vmatprep.subr.bf16.mxu0 0
    %1070 = vmatpush1.bf16.xpose.msra.mxu0 %v1060
    %1071 = vmatprep.subr.bf16.mxu0 0
    %1072 = vmatpush1.bf16.xpose.msra.mxu0 %v1063
    %1073 = vmatprep.subr.bf16.mxu0 0
    %1074 = vmatpush1.bf16.xpose.msra.mxu0 0
    %1075 = vmatprep.subr.bf16.mxu0 0
    %1076 = vmatpush1.bf16.xpose.msra.mxu0 0
    %1077 = vmatprep.subr.bf16.mxu0 0
    %1078 = vmatpush1.bf16.xpose.msra.mxu0 0
    %1079 = vmatprep.subr.bf16.mxu0 0
    %1080 = vmatpush1.bf16.xpose.msra.mxu0 0
    %1081 = vmatprep.subr.bf16.mxu0 0
    %1082 = vmatpush1.bf16.xpose.msra.mxu0 0
    %1083 = vmatprep.subr.bf16.mxu0 0
    %1084 = vmatpush1.bf16.xpose.msra.mxu0 0
    %1085 = vmatprep.subr.bf16.mxu0 0
    %1086 = vmatpush1.bf16.xpose.msra.mxu0 0
    %1087 = vmatprep.subr.bf16.mxu0 0
    %1088 = vmatpush1.bf16.xpose.msra.mxu0 0
    %1089 = vmatprep.subr.bf16.mxu0 0
    %1090 = vmatpush1.bf16.xpose.msra.mxu0 0
    %1091 = vmatprep.subr.bf16.mxu0 0
    %1092 = vmatpush1.bf16.xpose.msra.mxu0 0
    %1093 = vmatprep.subr.bf16.mxu0 0
    %1094 = vmatpush1.bf16.xpose.msra.mxu0 0
    %1095 = vmatprep.subr.bf16.mxu0 0
    %1096 = vmatpush1.bf16.xpose.msra.mxu0 0
    %1097 = vmatprep.mubr.bf16.mxu0 0
    %1098 = vmatmul.mubr.bf16.gmra.mrb[0].mxu0 %v1042
    %v1099 = vpop.f32.mrb[0].mxu0
    %v1100 = vadd.f32 %v106, %v1099
    %v1101 = vpop.f32.mrb[0].mxu0
    %v1102 = vpop.f32.mrb[0].mxu0
    %v1103 = vadd.f32 %v107, %v1102
    %v1104 = vpop.f32.mrb[0].mxu0
    %1105 = vmatprep.mubr.bf16.mxu0 0
    %1106 = vmatmul.mubr.bf16.gmra.mrb[0].mxu0 %v1045
    %v1107 = vpop.f32.mrb[0].mxu0
    %v1108 = vadd.f32 %v108, %v1107
    %v1109 = vpop.f32.mrb[0].mxu0
    %v1110 = vpop.f32.mrb[0].mxu0
    %v1111 = vadd.f32 %v109, %v1110
    %v1112 = vpop.f32.mrb[0].mxu0
    %1113 = vmatprep.mubr.bf16.mxu0 0
    %1114 = vmatmul.mubr.bf16.gmra.mrb[0].mxu0 %v1048
    %v1115 = vpop.f32.mrb[0].mxu0
    %v1116 = vadd.f32 %v110, %v1115
    %v1117 = vpop.f32.mrb[0].mxu0
    %v1118 = vpop.f32.mrb[0].mxu0
    %v1119 = vadd.f32 %v111, %v1118
    %v1120 = vpop.f32.mrb[0].mxu0
    %1121 = vmatprep.mubr.bf16.mxu0 0
    %1122 = vmatmul.mubr.bf16.gmra.mrb[0].mxu0 %v1051
    %v1123 = vpop.f32.mrb[0].mxu0
    %v1124 = vadd.f32 %v112, %v1123
    %v1125 = vpop.f32.mrb[0].mxu0
    %v1126 = vpop.f32.mrb[0].mxu0
    %v1127 = vadd.f32 %v113, %v1126
    %v1128 = vpop.f32.mrb[0].mxu0
    %1129 = vdwg.mxu0
    %v1130 = vsel %vm307, %v1100, -inf
    %1131 = vmax.xlane.f32.xlu0 %v1130
    %v1132 = vpop.xlane.xlu0 %1131
    %v1133 = vsel %vm307, %v1103, -inf
    %1134 = vmax.xlane.f32.xlu0 %v1133
    %v1135 = vpop.xlane.xlu0 %1134
    %v1136 = vsel %vm307, %v1108, -inf
    %1137 = vmax.xlane.f32.xlu0 %v1136
    %v1138 = vpop.xlane.xlu0 %1137
    %v1139 = vsel %vm307, %v1111, -inf
    %1140 = vmax.xlane.f32.xlu0 %v1139
    %v1141 = vpop.xlane.xlu0 %1140
    %v1142 = vsel %vm307, %v1116, -inf
    %1143 = vmax.xlane.f32.xlu0 %v1142
    %v1144 = vpop.xlane.xlu0 %1143
    %v1145 = vsel %vm307, %v1119, -inf
    %1146 = vmax.xlane.f32.xlu0 %v1145
    %v1147 = vpop.xlane.xlu0 %1146
    %v1148 = vsel %vm307, %v1124, -inf
    %1149 = vmax.xlane.f32.xlu0 %v1148
    %v1150 = vpop.xlane.xlu0 %1149
    %v1151 = vsel %vm307, %v1127, -inf
    %1152 = vmax.xlane.f32.xlu0 %v1151
    %v1153 = vpop.xlane.xlu0 %1152
    %v1154 = vsub.f32 %v1100, %v1132
    %v1155 = vsub.f32 %v1103, %v1135
    %v1156 = vsub.f32 %v1108, %v1138
    %v1157 = vsub.f32 %v1111, %v1141
    %v1158 = vsub.f32 %v1116, %v1144
    %v1159 = vsub.f32 %v1119, %v1147
    %v1160 = vsub.f32 %v1124, %v1150
    %v1161 = vsub.f32 %v1127, %v1153
    %v1162 = vmul.f32 %v1154, 1.442695
    %v1163 = vpow.pop %v1162
    %v1164 = vmul.f32 %v1155, 1.442695
    %v1165 = vpow.pop %v1164
    %v1166 = vmul.f32 %v1156, 1.442695
    %v1167 = vpow.pop %v1166
    %v1168 = vmul.f32 %v1157, 1.442695
    %v1169 = vpow.pop %v1168
    %v1170 = vmul.f32 %v1158, 1.442695
    %v1171 = vpow.pop %v1170
    %v1172 = vmul.f32 %v1159, 1.442695
    %v1173 = vpow.pop %v1172
    %v1174 = vmul.f32 %v1160, 1.442695
    %v1175 = vpow.pop %v1174
    %v1176 = vmul.f32 %v1161, 1.442695
    %v1177 = vpow.pop %v1176
    %v1178 = vsel %vm307, %v1163, 0.0
    %1179 = vadd.xlane.f32.xlu0 %v1178
    %v1180 = vpop.xlane.xlu0 %1179
    %v1181 = vsel %vm307, %v1165, 0.0
    %1182 = vadd.xlane.f32.xlu0 %v1181
    %v1183 = vpop.xlane.xlu0 %1182
    %v1184 = vsel %vm307, %v1167, 0.0
    %1185 = vadd.xlane.f32.xlu0 %v1184
    %v1186 = vpop.xlane.xlu0 %1185
    %v1187 = vsel %vm307, %v1169, 0.0
    %1188 = vadd.xlane.f32.xlu0 %v1187
    %v1189 = vpop.xlane.xlu0 %1188
    %v1190 = vsel %vm307, %v1171, 0.0
    %1191 = vadd.xlane.f32.xlu0 %v1190
    %v1192 = vpop.xlane.xlu0 %1191
    %v1193 = vsel %vm307, %v1173, 0.0
    %1194 = vadd.xlane.f32.xlu0 %v1193
    %v1195 = vpop.xlane.xlu0 %1194
    %v1196 = vsel %vm307, %v1175, 0.0
    %1197 = vadd.xlane.f32.xlu0 %v1196
    %v1198 = vpop.xlane.xlu0 %1197
    %v1199 = vsel %vm307, %v1177, 0.0
    %1200 = vadd.xlane.f32.xlu0 %v1199
    %v1201 = vpop.xlane.xlu0 %1200
    %v1202 = vrcp.pop %v1180
    %v1203 = vrcp.pop %v1183
    %v1204 = vrcp.pop %v1186
    %v1205 = vrcp.pop %v1189
    %v1206 = vrcp.pop %v1192
    %v1207 = vrcp.pop %v1195
    %v1208 = vrcp.pop %v1198
    %v1209 = vrcp.pop %v1201
    %v1210 = vmul.f32 %v1163, %v1202
    %v1211 = vmul.f32 %v1165, %v1203
    %v1212 = vmul.f32 %v1167, %v1204
    %v1213 = vmul.f32 %v1169, %v1205
    %v1214 = vmul.f32 %v1171, %v1206
    %v1215 = vmul.f32 %v1173, %v1207
    %v1216 = vmul.f32 %v1175, %v1208
    %v1217 = vmul.f32 %v1177, %v1209
    %v1218 = vpack.c.bf16 %v1211, %v1210
    %v1219 = vpack.c.bf16 %v1213, %v1212
    %v1220 = vpack.c.bf16 %v1215, %v1214
    %v1221 = vpack.c.bf16 %v1217, %v1216
    %1222 = vrot.lane.b32.xlu0 %v1025, 64
    %v1223 = vpop.permute.xlu0 %1222
    %1224 = vrot.lane.b32.xlu0 %v1026, 64
    %v1225 = vpop.permute.xlu0 %1224
    %1226 = vrot.lane.b32.xlu0 %v1027, 64
    %v1227 = vpop.permute.xlu0 %1226
    %1228 = vrot.lane.b32.xlu0 %v1028, 64
    %v1229 = vpop.permute.xlu0 %1228
    %v1235 = vsel %vm307, %v1218, 0
    %v1238 = vsel %vm307, %v1219, 0
    %v1241 = vsel %vm307, %v1220, 0
    %v1244 = vsel %vm307, %v1221, 0
    %1246 = vmatprep.subr.bf16.mxu0 0
    %1247 = vmatpush1.bf16.msra.mxu0 %v1223
    %1248 = vmatprep.subr.bf16.mxu0 0
    %1249 = vmatpush1.bf16.msra.mxu0 %v1225
    %1250 = vmatprep.subr.bf16.mxu0 0
    %1251 = vmatpush1.bf16.msra.mxu0 %v1227
    %1252 = vmatprep.subr.bf16.mxu0 0
    %1253 = vmatpush1.bf16.msra.mxu0 %v1229
    %1254 = vmatprep.subr.bf16.mxu0 0
    %1255 = vmatpush1.bf16.msra.mxu0 0
    %1256 = vmatprep.subr.bf16.mxu0 0
    %1257 = vmatpush1.bf16.msra.mxu0 0
    %1258 = vmatprep.subr.bf16.mxu0 0
    %1259 = vmatpush1.bf16.msra.mxu0 0
    %1260 = vmatprep.subr.bf16.mxu0 0
    %1261 = vmatpush1.bf16.msra.mxu0 0
    %1262 = vmatprep.subr.bf16.mxu0 0
    %1263 = vmatpush1.bf16.msra.mxu0 0
    %1264 = vmatprep.subr.bf16.mxu0 0
    %1265 = vmatpush1.bf16.msra.mxu0 0
    %1266 = vmatprep.subr.bf16.mxu0 0
    %1267 = vmatpush1.bf16.msra.mxu0 0
    %1268 = vmatprep.subr.bf16.mxu0 0
    %1269 = vmatpush1.bf16.msra.mxu0 0
    %1270 = vmatprep.subr.bf16.mxu0 0
    %1271 = vmatpush1.bf16.msra.mxu0 0
    %1272 = vmatprep.subr.bf16.mxu0 0
    %1273 = vmatpush1.bf16.msra.mxu0 0
    %1274 = vmatprep.subr.bf16.mxu0 0
    %1275 = vmatpush1.bf16.msra.mxu0 0
    %1276 = vmatprep.subr.bf16.mxu0 0
    %1277 = vmatpush1.bf16.msra.mxu0 0
    %1278 = vmatprep.mubr.bf16.mxu0 0
    %1279 = vmatmul.mubr.bf16.gmra.mrb[0].mxu0 %v1235
    %v1280 = vpop.f32.mrb[0].mxu0
    %v1281 = vadd.f32 0.0, %v1280
    %v1282 = vpop.f32.mrb[0].mxu0
    %v1283 = vpop.f32.mrb[0].mxu0
    %v1284 = vadd.f32 0.0, %v1283
    %v1285 = vpop.f32.mrb[0].mxu0
    %1286 = vmatprep.mubr.bf16.mxu0 0
    %1287 = vmatmul.mubr.bf16.gmra.mrb[0].mxu0 %v1238
    %v1288 = vpop.f32.mrb[0].mxu0
    %v1289 = vadd.f32 0.0, %v1288
    %v1290 = vpop.f32.mrb[0].mxu0
    %v1291 = vpop.f32.mrb[0].mxu0
    %v1292 = vadd.f32 0.0, %v1291
    %v1293 = vpop.f32.mrb[0].mxu0
    %1294 = vmatprep.mubr.bf16.mxu0 0
    %1295 = vmatmul.mubr.bf16.gmra.mrb[0].mxu0 %v1241
    %v1296 = vpop.f32.mrb[0].mxu0
    %v1297 = vadd.f32 0.0, %v1296
    %v1298 = vpop.f32.mrb[0].mxu0
    %v1299 = vpop.f32.mrb[0].mxu0
    %v1300 = vadd.f32 0.0, %v1299
    %v1301 = vpop.f32.mrb[0].mxu0
    %1302 = vmatprep.mubr.bf16.mxu0 0
    %1303 = vmatmul.mubr.bf16.gmra.mrb[0].mxu0 %v1244
    %v1304 = vpop.f32.mrb[0].mxu0
    %v1305 = vadd.f32 0.0, %v1304
    %v1306 = vpop.f32.mrb[0].mxu0
    %v1307 = vpop.f32.mrb[0].mxu0
    %v1308 = vadd.f32 0.0, %v1307
    %v1309 = vpop.f32.mrb[0].mxu0
    %1310 = vdwg.mxu0
    %v1311 = vld [vmem:[#allocation2 + $0x68] sm:$0xf]
    %v1312 = vld [vmem:[#allocation2 + $0x6c] sm:$0xf]
    %v1313 = vld [vmem:[#allocation2 + $0x70] sm:$0xf]
    %v1314 = vld [vmem:[#allocation2 + $0x74] sm:$0xf]
    %v1315 = vpack.c.bf16 %v1284, %v1281
    %v1316 = vpack.c.bf16 %v1292, %v1289
    %v1318 = vsel %vm217, %v1316, 0
    %v1321 = vsel %vm498, %v1312, 0
    %1323 = vmatprep.subr.bf16.mxu0 0
    %1324 = vmatpush1.bf16.msra.mxu0 %v1321
    %1325 = vmatprep.subr.bf16.mxu0 0
    %1326 = vmatpush1.bf16.msra.mxu0 0
    %1327 = vmatprep.subr.bf16.mxu0 0
    %1328 = vmatpush1.bf16.msra.mxu0 0
    %1329 = vmatprep.subr.bf16.mxu0 0
    %1330 = vmatpush1.bf16.msra.mxu0 0
    %1331 = vmatprep.subr.bf16.mxu0 0
    %1332 = vmatpush1.bf16.msra.mxu0 0
    %1333 = vmatprep.subr.bf16.mxu0 0
    %1334 = vmatpush1.bf16.msra.mxu0 0
    %1335 = vmatprep.subr.bf16.mxu0 0
    %1336 = vmatpush1.bf16.msra.mxu0 0
    %1337 = vmatprep.subr.bf16.mxu0 0
    %1338 = vmatpush1.bf16.msra.mxu0 0
    %1339 = vmatprep.subr.bf16.mxu0 0
    %1340 = vmatpush1.bf16.msra.mxu0 0
    %1341 = vmatprep.subr.bf16.mxu0 0
    %1342 = vmatpush1.bf16.msra.mxu0 0
    %1343 = vmatprep.subr.bf16.mxu0 0
    %1344 = vmatpush1.bf16.msra.mxu0 0
    %1345 = vmatprep.subr.bf16.mxu0 0
    %1346 = vmatpush1.bf16.msra.mxu0 0
    %1347 = vmatprep.subr.bf16.mxu0 0
    %1348 = vmatpush1.bf16.msra.mxu0 0
    %1349 = vmatprep.subr.bf16.mxu0 0
    %1350 = vmatpush1.bf16.msra.mxu0 0
    %1351 = vmatprep.subr.bf16.mxu0 0
    %1352 = vmatpush1.bf16.msra.mxu0 0
    %1353 = vmatprep.subr.bf16.mxu0 0
    %1354 = vmatpush1.bf16.msra.mxu0 0
    %1355 = vmatprep.mubr.bf16.mxu0 0
    %1356 = vmatmul.mubr.bf16.gmra.mrb[0].mxu0 %v1318
    %v1357 = vpop.f32.mrb[0].mxu0
    %v1358 = vadd.f32 0.0, %v1357
    %v1359 = vpop.f32.mrb[0].mxu0
    %v1360 = vpop.f32.mrb[0].mxu0
    %v1361 = vadd.f32 0.0, %v1360
    %v1362 = vpop.f32.mrb[0].mxu0
    %1363 = vdwg.mxu0
    %v1365 = vsel %vm217, %v1315, 0
    %v1368 = vsel %vm498, %v1311, 0
    %1370 = vmatprep.subr.bf16.mxu0 0
    %1371 = vmatpush1.bf16.msra.mxu0 %v1368
    %1372 = vmatprep.subr.bf16.mxu0 0
    %1373 = vmatpush1.bf16.msra.mxu0 0
    %1374 = vmatprep.subr.bf16.mxu0 0
    %1375 = vmatpush1.bf16.msra.mxu0 0
    %1376 = vmatprep.subr.bf16.mxu0 0
    %1377 = vmatpush1.bf16.msra.mxu0 0
    %1378 = vmatprep.subr.bf16.mxu0 0
    %1379 = vmatpush1.bf16.msra.mxu0 0
    %1380 = vmatprep.subr.bf16.mxu0 0
    %1381 = vmatpush1.bf16.msra.mxu0 0
    %1382 = vmatprep.subr.bf16.mxu0 0
    %1383 = vmatpush1.bf16.msra.mxu0 0
    %1384 = vmatprep.subr.bf16.mxu0 0
    %1385 = vmatpush1.bf16.msra.mxu0 0
    %1386 = vmatprep.subr.bf16.mxu0 0
    %1387 = vmatpush1.bf16.msra.mxu0 0
    %1388 = vmatprep.subr.bf16.mxu0 0
    %1389 = vmatpush1.bf16.msra.mxu0 0
    %1390 = vmatprep.subr.bf16.mxu0 0
    %1391 = vmatpush1.bf16.msra.mxu0 0
    %1392 = vmatprep.subr.bf16.mxu0 0
    %1393 = vmatpush1.bf16.msra.mxu0 0
    %1394 = vmatprep.subr.bf16.mxu0 0
    %1395 = vmatpush1.bf16.msra.mxu0 0
    %1396 = vmatprep.subr.bf16.mxu0 0
    %1397 = vmatpush1.bf16.msra.mxu0 0
    %1398 = vmatprep.subr.bf16.mxu0 0
    %1399 = vmatpush1.bf16.msra.mxu0 0
    %1400 = vmatprep.subr.bf16.mxu0 0
    %1401 = vmatpush1.bf16.msra.mxu0 0
    %1402 = vmatprep.mubr.bf16.mxu0 0
    %1403 = vmatmul.mubr.bf16.gmra.mrb[0].mxu0 %v1365
    %v1404 = vpop.f32.mrb[0].mxu0
    %v1405 = vadd.f32 %v1358, %v1404
    %v1406 = vpop.f32.mrb[0].mxu0
    %v1407 = vpop.f32.mrb[0].mxu0
    %v1408 = vadd.f32 %v1361, %v1407
    %v1409 = vpop.f32.mrb[0].mxu0
    %1410 = vdwg.mxu0
    %v1411 = vpack.c.bf16 %v1300, %v1297
    %v1413 = vsel %vm217, %v1411, 0
    %v1416 = vsel %vm498, %v1313, 0
    %1418 = vmatprep.subr.bf16.mxu0 0
    %1419 = vmatpush1.bf16.msra.mxu0 %v1416
    %1420 = vmatprep.subr.bf16.mxu0 0
    %1421 = vmatpush1.bf16.msra.mxu0 0
    %1422 = vmatprep.subr.bf16.mxu0 0
    %1423 = vmatpush1.bf16.msra.mxu0 0
    %1424 = vmatprep.subr.bf16.mxu0 0
    %1425 = vmatpush1.bf16.msra.mxu0 0
    %1426 = vmatprep.subr.bf16.mxu0 0
    %1427 = vmatpush1.bf16.msra.mxu0 0
    %1428 = vmatprep.subr.bf16.mxu0 0
    %1429 = vmatpush1.bf16.msra.mxu0 0
    %1430 = vmatprep.subr.bf16.mxu0 0
    %1431 = vmatpush1.bf16.msra.mxu0 0
    %1432 = vmatprep.subr.bf16.mxu0 0
    %1433 = vmatpush1.bf16.msra.mxu0 0
    %1434 = vmatprep.subr.bf16.mxu0 0
    %1435 = vmatpush1.bf16.msra.mxu0 0
    %1436 = vmatprep.subr.bf16.mxu0 0
    %1437 = vmatpush1.bf16.msra.mxu0 0
    %1438 = vmatprep.subr.bf16.mxu0 0
    %1439 = vmatpush1.bf16.msra.mxu0 0
    %1440 = vmatprep.subr.bf16.mxu0 0
    %1441 = vmatpush1.bf16.msra.mxu0 0
    %1442 = vmatprep.subr.bf16.mxu0 0
    %1443 = vmatpush1.bf16.msra.mxu0 0
    %1444 = vmatprep.subr.bf16.mxu0 0
    %1445 = vmatpush1.bf16.msra.mxu0 0
    %1446 = vmatprep.subr.bf16.mxu0 0
    %1447 = vmatpush1.bf16.msra.mxu0 0
    %1448 = vmatprep.subr.bf16.mxu0 0
    %1449 = vmatpush1.bf16.msra.mxu0 0
    %1450 = vmatprep.mubr.bf16.mxu0 0
    %1451 = vmatmul.mubr.bf16.gmra.mrb[0].mxu0 %v1413
    %v1452 = vpop.f32.mrb[0].mxu0
    %v1453 = vadd.f32 0.0, %v1452
    %v1454 = vpop.f32.mrb[0].mxu0
    %v1455 = vpop.f32.mrb[0].mxu0
    %v1456 = vadd.f32 0.0, %v1455
    %v1457 = vpop.f32.mrb[0].mxu0
    %1458 = vdwg.mxu0
    %v1459 = vadd.f32 %v1405, %v1453
    %v1460 = vadd.f32 %v1408, %v1456
    %v1461 = vpack.c.bf16 %v1308, %v1305
    %v1463 = vsel %vm217, %v1461, 0
    %v1466 = vsel %vm498, %v1314, 0
    %1468 = vmatprep.subr.bf16.mxu0 0
    %1469 = vmatpush1.bf16.msra.mxu0 %v1466
    %1470 = vmatprep.subr.bf16.mxu0 0
    %1471 = vmatpush1.bf16.msra.mxu0 0
    %1472 = vmatprep.subr.bf16.mxu0 0
    %1473 = vmatpush1.bf16.msra.mxu0 0
    %1474 = vmatprep.subr.bf16.mxu0 0
    %1475 = vmatpush1.bf16.msra.mxu0 0
    %1476 = vmatprep.subr.bf16.mxu0 0
    %1477 = vmatpush1.bf16.msra.mxu0 0
    %1478 = vmatprep.subr.bf16.mxu0 0
    %1479 = vmatpush1.bf16.msra.mxu0 0
    %1480 = vmatprep.subr.bf16.mxu0 0
    %1481 = vmatpush1.bf16.msra.mxu0 0
    %1482 = vmatprep.subr.bf16.mxu0 0
    %1483 = vmatpush1.bf16.msra.mxu0 0
    %1484 = vmatprep.subr.bf16.mxu0 0
    %1485 = vmatpush1.bf16.msra.mxu0 0
    %1486 = vmatprep.subr.bf16.mxu0 0
    %1487 = vmatpush1.bf16.msra.mxu0 0
    %1488 = vmatprep.subr.bf16.mxu0 0
    %1489 = vmatpush1.bf16.msra.mxu0 0
    %1490 = vmatprep.subr.bf16.mxu0 0
    %1491 = vmatpush1.bf16.msra.mxu0 0
    %1492 = vmatprep.subr.bf16.mxu0 0
    %1493 = vmatpush1.bf16.msra.mxu0 0
    %1494 = vmatprep.subr.bf16.mxu0 0
    %1495 = vmatpush1.bf16.msra.mxu0 0
    %1496 = vmatprep.subr.bf16.mxu0 0
    %1497 = vmatpush1.bf16.msra.mxu0 0
    %1498 = vmatprep.subr.bf16.mxu0 0
    %1499 = vmatpush1.bf16.msra.mxu0 0
    %1500 = vmatprep.mubr.bf16.mxu0 0
    %1501 = vmatmul.mubr.bf16.gmra.mrb[0].mxu0 %v1463
    %v1502 = vpop.f32.mrb[0].mxu0
    %v1503 = vadd.f32 0.0, %v1502
    %v1504 = vpop.f32.mrb[0].mxu0
    %v1505 = vpop.f32.mrb[0].mxu0
    %v1506 = vadd.f32 0.0, %v1505
    %v1507 = vpop.f32.mrb[0].mxu0
    %1508 = vdwg.mxu0
    %v1509 = vadd.f32 %v1459, %v1503
    %v1510 = vadd.f32 %v1460, %v1506
    %v1511 = vld [vmem:[#allocation5 + $0x98] sm:$0x1]
    %v1512 = vlaneseq
    %v1513 = vshrl.u32 %v1512, 7
    %v1514 = vsub.s32 0, %v1513
    %v1515 = vrot.slane %v1511, %v1514
    %v1516 = vadd.f32 %v1509, %v1515
    %v1517 = vadd.f32 %v1510, %v1515
    %v1518 = vadd.f32 %v937, %v1516
    %v1519 = vadd.f32 %v938, %v1517
    %v1520 = vld [vmem:[#allocation5 + $0xa0] sm:$0x1]
    %v1521 = vld [vmem:[#allocation5 + $0xa8] sm:$0x1]
    %v1522 = vsel %vm136, %v1518, 0.0
    %1523 = vadd.xlane.f32.xlu0 %v1522
    %v1524 = vpop.xlane.xlu0 %1523
    %v1525 = vsel %vm136, %v1519, 0.0
    %1526 = vadd.xlane.f32.xlu0 %v1525
    %v1527 = vpop.xlane.xlu0 %1526
    %v1528 = vmul.f32 %v1524, 0.03125
    %v1529 = vmul.f32 %v1527, 0.03125
    %v1530 = vmul.f32 %v1518, %v1518
    %v1531 = vmul.f32 %v1519, %v1519
    %v1532 = vsel %vm136, %v1530, 0.0
    %1533 = vadd.xlane.f32.xlu0 %v1532
    %v1534 = vpop.xlane.xlu0 %1533
    %v1535 = vsel %vm136, %v1531, 0.0
    %1536 = vadd.xlane.f32.xlu0 %v1535
    %v1537 = vpop.xlane.xlu0 %1536
    %v1538 = vmul.f32 %v1534, 0.03125
    %v1539 = vmul.f32 %v1537, 0.03125
    %v1540 = vmul.f32 %v1528, %v1528
    %v1541 = vmul.f32 %v1529, %v1529
    %v1542 = vsub.f32 %v1538, %v1540
    %v1543 = vsub.f32 %v1539, %v1541
    %v1544 = vsub.f32 %v1518, %v1528
    %v1545 = vsub.f32 %v1519, %v1529
    %v1546 = vadd.f32 %v1542, 1e-05
    %v1547 = vadd.f32 %v1543, 1e-05
    %v1548 = vrsqrt.pop %v1546
    %v1549 = vrsqrt.pop %v1547
    %v1550 = vmul.f32 %v1544, %v1548
    %v1551 = vmul.f32 %v1545, %v1549
    %v1552 = vlaneseq
    %v1553 = vshrl.u32 %v1552, 7
    %v1554 = vsub.s32 0, %v1553
    %v1555 = vrot.slane %v1520, %v1554
    %v1556 = vmul.f32 %v1550, %v1555
    %v1557 = vmul.f32 %v1551, %v1555
    %v1558 = vlaneseq
    %v1559 = vshrl.u32 %v1558, 7
    %v1560 = vsub.s32 0, %v1559
    %v1561 = vrot.slane %v1521, %v1560
    %v1562 = vadd.f32 %v1556, %v1561
    %v1563 = vadd.f32 %v1557, %v1561
    %v1564 = vpack.c.bf16 %v1563, %v1562
    %v1565 = vld [vmem:[#allocation2 + $0x78] sm:$0xf]
    %v1566 = vld [vmem:[#allocation2 + $0x7c] sm:$0xf]
    %v1567 = vld [vmem:[#allocation2 + $0x80] sm:$0xf]
    %v1568 = vld [vmem:[#allocation2 + $0x84] sm:$0xf]
    %v1569 = vld [vmem:[#allocation5 + $0xb0] sm:$0x1]
    %v1570 = vlaneseq
    %v1571 = vshrl.u32 %v1570, 7
    %v1572 = vsub.s32 0, %v1571
    %v1573 = vrot.slane %v1569, %v1572
    %v1578 = vunpack.c.l.b16 %v1565
    %v1579 = vunpack.c.l.b16 %v1566
    %v1580 = vunpack.c.l.b16 %v1567
    %v1581 = vunpack.c.l.b16 %v1568
    %v1582 = vpack.c.b16 %v1579, %v1578
    %v1583 = vpack.c.b16 %v1581, %v1580
    %v1587 = vsel %vm136, %v1564, 0
    %1589 = vmatprep.subr.bf16.mxu0 0
    %1590 = vmatpush1.bf16.msra.mxu0 %v1582
    %1591 = vmatprep.subr.bf16.mxu0 0
    %1592 = vmatpush1.bf16.msra.mxu0 %v1583
    %1593 = vmatprep.subr.bf16.mxu0 0
    %1594 = vmatpush1.bf16.msra.mxu0 0
    %1595 = vmatprep.subr.bf16.mxu0 0
    %1596 = vmatpush1.bf16.msra.mxu0 0
    %1597 = vmatprep.subr.bf16.mxu0 0
    %1598 = vmatpush1.bf16.msra.mxu0 0
    %1599 = vmatprep.subr.bf16.mxu0 0
    %1600 = vmatpush1.bf16.msra.mxu0 0
    %1601 = vmatprep.subr.bf16.mxu0 0
    %1602 = vmatpush1.bf16.msra.mxu0 0
    %1603 = vmatprep.subr.bf16.mxu0 0
    %1604 = vmatpush1.bf16.msra.mxu0 0
    %1605 = vmatprep.subr.bf16.mxu0 0
    %1606 = vmatpush1.bf16.msra.mxu0 0
    %1607 = vmatprep.subr.bf16.mxu0 0
    %1608 = vmatpush1.bf16.msra.mxu0 0
    %1609 = vmatprep.subr.bf16.mxu0 0
    %1610 = vmatpush1.bf16.msra.mxu0 0
    %1611 = vmatprep.subr.bf16.mxu0 0
    %1612 = vmatpush1.bf16.msra.mxu0 0
    %1613 = vmatprep.subr.bf16.mxu0 0
    %1614 = vmatpush1.bf16.msra.mxu0 0
    %1615 = vmatprep.subr.bf16.mxu0 0
    %1616 = vmatpush1.bf16.msra.mxu0 0
    %1617 = vmatprep.subr.bf16.mxu0 0
    %1618 = vmatpush1.bf16.msra.mxu0 0
    %1619 = vmatprep.subr.bf16.mxu0 0
    %1620 = vmatpush1.bf16.msra.mxu0 0
    %1621 = vmatprep.mubr.bf16.mxu0 0
    %1622 = vmatmul.mubr.bf16.gmra.mrb[0].mxu0 %v1587
    %v1623 = vpop.f32.mrb[0].mxu0
    %v1624 = vadd.f32 %v1573, %v1623
    %v1625 = vpop.f32.mrb[0].mxu0
    %v1626 = vpop.f32.mrb[0].mxu0
    %v1627 = vadd.f32 %v1573, %v1626
    %v1628 = vpop.f32.mrb[0].mxu0
    %1629 = vdwg.mxu0
    %v1630 = vmax.f32 %v1624, 0.0
    %v1631 = vmax.f32 %v1627, 0.0
    %v1632 = vpack.c.bf16 %v1631, %v1630
    %v1633 = vld [vmem:[#allocation2 + $0x88] sm:$0xf]
    %v1634 = vld [vmem:[#allocation2 + $0x8c] sm:$0xf]
    %v1635 = vld [vmem:[#allocation2 + $0x90] sm:$0xf]
    %v1636 = vld [vmem:[#allocation2 + $0x94] sm:$0xf]
    %v1637 = vld [vmem:[#allocation2 + $0x98] sm:$0xf]
    %v1638 = vld [vmem:[#allocation2 + $0x9c] sm:$0xf]
    %v1639 = vld [vmem:[#allocation2 + $0xa0] sm:$0xf]
    %v1640 = vld [vmem:[#allocation2 + $0xa4] sm:$0xf]
    %v1641 = vld [vmem:[#allocation5 + $0xb8] sm:$0x1]
    %v1642 = vlaneseq
    %v1643 = vshrl.u32 %v1642, 7
    %v1644 = vsub.s32 0, %v1643
    %v1645 = vrot.slane %v1641, %v1644
    %v1654 = vunpack.c.l.b16 %v1633
    %v1655 = vunpack.c.l.b16 %v1634
    %v1656 = vunpack.c.l.b16 %v1635
    %v1657 = vunpack.c.l.b16 %v1636
    %v1658 = vunpack.c.l.b16 %v1637
    %v1659 = vunpack.c.l.b16 %v1638
    %v1660 = vunpack.c.l.b16 %v1639
    %v1661 = vunpack.c.l.b16 %v1640
    %v1662 = vpack.c.b16 %v1655, %v1654
    %v1663 = vpack.c.b16 %v1657, %v1656
    %v1664 = vpack.c.b16 %v1659, %v1658
    %v1665 = vpack.c.b16 %v1661, %v1660
    %v1671 = vsel %vm307, %v1632, 0
    %1673 = vmatprep.subr.bf16.mxu0 0
    %1674 = vmatpush1.bf16.msra.mxu0 %v1662
    %1675 = vmatprep.subr.bf16.mxu0 0
    %1676 = vmatpush1.bf16.msra.mxu0 %v1663
    %1677 = vmatprep.subr.bf16.mxu0 0
    %1678 = vmatpush1.bf16.msra.mxu0 %v1664
    %1679 = vmatprep.subr.bf16.mxu0 0
    %1680 = vmatpush1.bf16.msra.mxu0 %v1665
    %1681 = vmatprep.subr.bf16.mxu0 0
    %1682 = vmatpush1.bf16.msra.mxu0 0
    %1683 = vmatprep.subr.bf16.mxu0 0
    %1684 = vmatpush1.bf16.msra.mxu0 0
    %1685 = vmatprep.subr.bf16.mxu0 0
    %1686 = vmatpush1.bf16.msra.mxu0 0
    %1687 = vmatprep.subr.bf16.mxu0 0
    %1688 = vmatpush1.bf16.msra.mxu0 0
    %1689 = vmatprep.subr.bf16.mxu0 0
    %1690 = vmatpush1.bf16.msra.mxu0 0
    %1691 = vmatprep.subr.bf16.mxu0 0
    %1692 = vmatpush1.bf16.msra.mxu0 0
    %1693 = vmatprep.subr.bf16.mxu0 0
    %1694 = vmatpush1.bf16.msra.mxu0 0
    %1695 = vmatprep.subr.bf16.mxu0 0
    %1696 = vmatpush1.bf16.msra.mxu0 0
    %1697 = vmatprep.subr.bf16.mxu0 0
    %1698 = vmatpush1.bf16.msra.mxu0 0
    %1699 = vmatprep.subr.bf16.mxu0 0
    %1700 = vmatpush1.bf16.msra.mxu0 0
    %1701 = vmatprep.subr.bf16.mxu0 0
    %1702 = vmatpush1.bf16.msra.mxu0 0
    %1703 = vmatprep.subr.bf16.mxu0 0
    %1704 = vmatpush1.bf16.msra.mxu0 0
    %1705 = vmatprep.mubr.bf16.mxu0 0
    %1706 = vmatmul.mubr.bf16.gmra.mrb[0].mxu0 %v1671
    %v1707 = vpop.f32.mrb[0].mxu0
    %v1708 = vadd.f32 %v1645, %v1707
    %v1709 = vpop.f32.mrb[0].mxu0
    %v1710 = vpop.f32.mrb[0].mxu0
    %v1711 = vadd.f32 %v1645, %v1710
    %v1712 = vpop.f32.mrb[0].mxu0
    %1713 = vdwg.mxu0
    %v1714 = vadd.f32 %v1562, %v1708
    %v1715 = vadd.f32 %v1563, %v1711
    %v1716 = vld [vmem:[#allocation5 + $0xc0] sm:$0x1]
    %v1717 = vld [vmem:[#allocation5 + $0xc8] sm:$0x1]
    %v1718 = vsel %vm136, %v1714, 0.0
    %1719 = vadd.xlane.f32.xlu0 %v1718
    %v1720 = vpop.xlane.xlu0 %1719
    %v1721 = vsel %vm136, %v1715, 0.0
    %1722 = vadd.xlane.f32.xlu0 %v1721
    %v1723 = vpop.xlane.xlu0 %1722
    %v1724 = vmul.f32 %v1720, 0.03125
    %v1725 = vmul.f32 %v1723, 0.03125
    %v1726 = vmul.f32 %v1714, %v1714
    %v1727 = vmul.f32 %v1715, %v1715
    %v1728 = vsel %vm136, %v1726, 0.0
    %1729 = vadd.xlane.f32.xlu0 %v1728
    %v1730 = vpop.xlane.xlu0 %1729
    %v1731 = vsel %vm136, %v1727, 0.0
    %1732 = vadd.xlane.f32.xlu0 %v1731
    %v1733 = vpop.xlane.xlu0 %1732
    %v1734 = vmul.f32 %v1730, 0.03125
    %v1735 = vmul.f32 %v1733, 0.03125
    %v1736 = vmul.f32 %v1724, %v1724
    %v1737 = vmul.f32 %v1725, %v1725
    %v1738 = vsub.f32 %v1734, %v1736
    %v1739 = vsub.f32 %v1735, %v1737
    %v1740 = vsub.f32 %v1714, %v1724
    %v1741 = vsub.f32 %v1715, %v1725
    %v1742 = vadd.f32 %v1738, 1e-05
    %v1743 = vadd.f32 %v1739, 1e-05
    %v1744 = vrsqrt.pop %v1742
    %v1745 = vrsqrt.pop %v1743
    %v1746 = vmul.f32 %v1740, %v1744
    %v1747 = vmul.f32 %v1741, %v1745
    %v1748 = vlaneseq
    %v1749 = vshrl.u32 %v1748, 7
    %v1750 = vsub.s32 0, %v1749
    %v1751 = vrot.slane %v1716, %v1750
    %v1752 = vmul.f32 %v1746, %v1751
    %v1753 = vmul.f32 %v1747, %v1751
    %v1754 = vlaneseq
    %v1755 = vshrl.u32 %v1754, 7
    %v1756 = vsub.s32 0, %v1755
    %v1757 = vrot.slane %v1717, %v1756
    %v1758 = vadd.f32 %v1752, %v1757
    %v1759 = vadd.f32 %v1753, %v1757
    %v1760 = vpack.c.bf16 %v1759, %v1758
    %v1761 = vld [vmem:[#allocation2 + $0xa8] sm:$0xf]
    %v1762 = vld [vmem:[#allocation2 + $0xac] sm:$0xf]
    %v1763 = vld [vmem:[#allocation2 + $0xb0] sm:$0xf]
    %v1764 = vld [vmem:[#allocation2 + $0xb4] sm:$0xf]
    %v1765 = vld [vmem:[#allocation5 + $0xd0] sm:$0x1]
    %v1766 = vlaneseq
    %v1767 = vshrl.u32 %v1766, 7
    %v1768 = vsub.s32 0, %v1767
    %v1769 = vrot.slane %v1765, %v1768
    %v1774 = vunpack.c.l.b16 %v1761
    %v1775 = vunpack.c.l.b16 %v1762
    %v1776 = vunpack.c.l.b16 %v1763
    %v1777 = vunpack.c.l.b16 %v1764
    %v1778 = vpack.c.b16 %v1775, %v1774
    %v1779 = vpack.c.b16 %v1777, %v1776
    %v1783 = vsel %vm136, %v1760, 0
    %1785 = vmatprep.subr.bf16.mxu0 0
    %1786 = vmatpush1.bf16.msra.mxu0 %v1778
    %1787 = vmatprep.subr.bf16.mxu0 0
    %1788 = vmatpush1.bf16.msra.mxu0 %v1779
    %1789 = vmatprep.subr.bf16.mxu0 0
    %1790 = vmatpush1.bf16.msra.mxu0 0
    %1791 = vmatprep.subr.bf16.mxu0 0
    %1792 = vmatpush1.bf16.msra.mxu0 0
    %1793 = vmatprep.subr.bf16.mxu0 0
    %1794 = vmatpush1.bf16.msra.mxu0 0
    %1795 = vmatprep.subr.bf16.mxu0 0
    %1796 = vmatpush1.bf16.msra.mxu0 0
    %1797 = vmatprep.subr.bf16.mxu0 0
    %1798 = vmatpush1.bf16.msra.mxu0 0
    %1799 = vmatprep.subr.bf16.mxu0 0
    %1800 = vmatpush1.bf16.msra.mxu0 0
    %1801 = vmatprep.subr.bf16.mxu0 0
    %1802 = vmatpush1.bf16.msra.mxu0 0
    %1803 = vmatprep.subr.bf16.mxu0 0
    %1804 = vmatpush1.bf16.msra.mxu0 0
    %1805 = vmatprep.subr.bf16.mxu0 0
    %1806 = vmatpush1.bf16.msra.mxu0 0
    %1807 = vmatprep.subr.bf16.mxu0 0
    %1808 = vmatpush1.bf16.msra.mxu0 0
    %1809 = vmatprep.subr.bf16.mxu0 0
    %1810 = vmatpush1.bf16.msra.mxu0 0
    %1811 = vmatprep.subr.bf16.mxu0 0
    %1812 = vmatpush1.bf16.msra.mxu0 0
    %1813 = vmatprep.subr.bf16.mxu0 0
    %1814 = vmatpush1.bf16.msra.mxu0 0
    %1815 = vmatprep.subr.bf16.mxu0 0
    %1816 = vmatpush1.bf16.msra.mxu0 0
    %1817 = vmatprep.mubr.bf16.mxu0 0
    %1818 = vmatmul.mubr.bf16.gmra.mrb[0].mxu0 %v1783
    %v1819 = vpop.f32.mrb[0].mxu0
    %v1820 = vadd.f32 %v1769, %v1819
    %v1821 = vpop.f32.mrb[0].mxu0
    %v1822 = vpop.f32.mrb[0].mxu0
    %v1823 = vadd.f32 %v1769, %v1822
    %v1824 = vpop.f32.mrb[0].mxu0
    %1825 = vdwg.mxu0
    %1826 = vst.msk [vmem:[#allocation7] sm:$0xff] %vm61, %v1820
    %1827 = vst.msk [vmem:[#allocation7 + $0x8] sm:$0xff] %vm61, %v1823
    // Predicated region
    $region22: #{forward_pallas.1} parent=1 // pred_check
      _
    $region23: #{forward_pallas.1} parent=1 // pred_check_branch
      %1829 = sbr.rel (0) target = $region25
    $region24: #{forward_pallas.1} parent=1 // pred_region
      %s1831 = ssub.s32 256, 256
      %1832 = vsyncadd [#allocation4], %s1831
      %s1833 = sshll.u32 [#allocation7], 4
      %s1834 = int_to_ptr.vmem [resolvable:$true] %s1833
      %1839 = dma.vmem_to_hbm [thread:$0]  %s1834, 256, %s3, [#allocation4], 128, 128, 8
    $region25: #{forward_pallas.1} parent=1 // pred_fallthru
      _
    // Predicated region
    $region26: #{forward_pallas.1} parent=1 // pred_check
      _
    $region27: #{forward_pallas.1} parent=1 // pred_check_branch
      %1841 = sbr.rel (0) target = $region29
    $region28: #{forward_pallas.1} parent=1 // pred_region
      %1842 = dma.done [#allocation4], 256
    $region29: #{forward_pallas.1} parent=1 // pred_fallthru
      _
    %1843 = vsyncpa [#allocation3], 1
    %1844 = vsyncpa [#allocation6], 1
    %1845 = vsyncpa [#allocation4], 1

</llo_original>
